<compile_context>
chip_gen: v7x
topology: tpu7x:2x2x1
jax: 0.10.0
libtpu: 0.0.40
codegen_flags: <defaults>
</compile_context>

<pallas_src>
from functools import partial

import jax
import jax.numpy as jnp
from jax.experimental import pallas as pl
from jax.experimental.pallas import tpu as pltpu


def _round_up(x, m):
    return (x + m - 1) // m * m


def _suppix_pool_kernel(lo_ref, hi_ref, img_ref, spx_ref, out_ref,
                        acc_ref, *rest, mode, tkp, prec):
    """lo/hi_ref: (B, nN) int32 in SMEM — per-(batch, N-tile) Kp-chunk range.
    img_ref: (1, tC, tN) float, spx_ref: (1, 1, tN) int32, out_ref: (1, tC, Kp).
    acc_ref: (tC, Kp) f32 scratch; rest == (cnt_ref,) for mean ((1, Kp) f32)."""
    cnt_ref = rest[0] if mode == "mean" else None
    b = pl.program_id(0)
    n = pl.program_id(2)
    n_last = pl.num_programs(2) - 1

    @pl.when(n == 0)
    def _():
        if mode == "max":
            acc_ref[...] = jnp.full(acc_ref.shape, -jnp.inf, acc_ref.dtype)
        else:
            acc_ref[...] = jnp.zeros(acc_ref.shape, acc_ref.dtype)
        if cnt_ref is not None:
            cnt_ref[...] = jnp.zeros(cnt_ref.shape, cnt_ref.dtype)

    img = img_ref[0]                                   # (tC, tN)
    spx = spx_ref[0]                                   # (1, tN) int32
    tN = img.shape[-1]

    # Only visit the Kp-chunks whose label range intersects this pixel tile
    # (superpixels are spatially coherent -> small contiguous label range).
    lo = lo_ref[b, n]
    hi = hi_ref[b, n]

    if mode == "max":
        img_f = img.astype(jnp.float32)
        neg_inf = jnp.float32(-jnp.inf)

        @pl.loop(lo, hi)
        def _(kc):
            k0 = kc * tkp
            ids = jax.lax.broadcasted_iota(jnp.int32, (tkp, tN), 0) + k0
            chunk_mask = spx == ids                            # (tkp, tN)
            vals = jnp.where(chunk_mask[None, :, :], img_f[:, None, :], neg_inf)
            tmax = jnp.max(vals, axis=-1)                      # (tC, tkp)
            sl = pl.ds(pl.multiple_of(k0, tkp), tkp)
            acc_ref[:, sl] = jnp.maximum(acc_ref[:, sl], tmax)
    else:  # "sum" / "mean": per-chunk one-hot MXU contraction over pixels.
        dims = (((1,), (1,)), ((), ()))                        # contract pixels
        ones_row = jnp.ones((1, tN), img.dtype)                # loop-invariant

        @pl.loop(lo, hi)
        def _(kc):
            k0 = kc * tkp
            ids = jax.lax.broadcasted_iota(jnp.int32, (tkp, tN), 0) + k0
            onehot = (spx == ids).astype(img.dtype)            # (tkp, tN)
            sl = pl.ds(pl.multiple_of(k0, tkp), tkp)
            acc_ref[:, sl] += jax.lax.dot_general(
                img, onehot, dimension_numbers=dims,
                preferred_element_type=jnp.float32, precision=prec)
            if cnt_ref is not None:
                # 0/1 operands -> exact integer counts at any MXU precision.
                cnt_ref[:, sl] += jax.lax.dot_general(
                    ones_row, onehot, dimension_numbers=dims,
                    preferred_element_type=jnp.float32)

    @pl.when(n == n_last)
    def _():
        acc = acc_ref[...]
        if mode == "max":
            out = jnp.where(acc > -jnp.inf, acc, 0.0)          # empty bins -> 0
        elif mode == "mean":
            out = acc / jnp.maximum(cnt_ref[...], 1.0)
        else:
            out = acc
        out_ref[0] = out.astype(out_ref.dtype)


def _suppix_pool_batched(img, spx, Kp, mode):
    """img: (B, C, N) float, spx: (B, N) int32.  Returns (B, C, Kp)."""
    B, C, N = img.shape

    if mode == "max":
        # VPU path: keep the (tC, tkp, tN) select temporary small.
        tc_cap, tn_cap, tkp = 16, 512, 128
    else:
        # MXU path: tall channel tile + 256-wide label chunks (v6e/v7x MXU-N).
        tc_cap, tn_cap, tkp = 128, 1024, 256

    # Channel tiling; keep >= 2 parallel grid iterations for v7x megacore.
    C_pad = _round_up(max(C, 8), 8)
    tc = min(tc_cap, C_pad)
    if B == 1 and C_pad > 8 and C_pad // tc < 2:
        tc = max(8, _round_up(C_pad // 2, 8))
    C_pad = _round_up(C_pad, tc)

    tn = min(tn_cap, _round_up(N, 128))                # lane-dense N tiles
    N_pad = _round_up(N, tn)
    nN = N_pad // tn

    # Pad only when needed (avoid an extra HBM round trip for aligned inputs).
    if C_pad == C and N_pad == N:
        img_p = img
    else:
        img_p = jnp.zeros((B, C_pad, N_pad), img.dtype).at[:, :C, :N].set(img)
    if N_pad == N:
        spx_p = spx.reshape(B, 1, N).astype(jnp.int32)
    else:
        spx_p = jnp.full((B, 1, N_pad), -1, jnp.int32).at[:, 0, :N].set(
            spx.astype(jnp.int32))                     # -1 never matches a bin

    # Per-(batch, N-tile) label-chunk range, scalar-prefetched into SMEM.
    spx_tiles = spx_p.reshape(B, nN, tn)
    valid = spx_tiles >= 0
    kmin = jnp.min(jnp.where(valid, spx_tiles, Kp), axis=-1)   # (B, nN)
    kmax = jnp.max(jnp.where(valid, spx_tiles, -1), axis=-1)   # (B, nN)
    has = kmax >= 0
    chunk_lo = jnp.where(has, kmin // tkp, 0).astype(jnp.int32)
    chunk_hi = jnp.where(has, kmax // tkp + 1, 0).astype(jnp.int32)

    prec = (jax.lax.Precision.HIGHEST if img.dtype == jnp.float32
            else jax.lax.Precision.DEFAULT)

    scratch = [pltpu.VMEM((tc, Kp), jnp.float32)]      # per-(b, c) accumulator
    if mode == "mean":
        scratch.append(pltpu.VMEM((1, Kp), jnp.float32))   # per-bin counts

    grid = (B, C_pad // tc, N_pad // tn)               # n innermost (reduction)

    out = pl.pallas_call(
        partial(_suppix_pool_kernel, mode=mode, tkp=tkp, prec=prec),
        out_shape=jax.ShapeDtypeStruct((B, C_pad, Kp), img.dtype),
        grid_spec=pltpu.PrefetchScalarGridSpec(
            num_scalar_prefetch=2,
            grid=grid,
            in_specs=[
                pl.BlockSpec((1, tc, tn), lambda b, c, n, lo, hi: (b, c, n)),
                pl.BlockSpec((1, 1, tn), lambda b, c, n, lo, hi: (b, 0, n)),
            ],
            out_specs=pl.BlockSpec((1, tc, Kp), lambda b, c, n, lo, hi: (b, c, 0)),
            scratch_shapes=scratch,
        ),
        compiler_params=pltpu.CompilerParams(
            dimension_semantics=("parallel", "parallel", "arbitrary"),
            vmem_limit_bytes=48 * 1024 * 1024,         # leaves headroom on v7x
        ),
    )(chunk_lo, chunk_hi, img_p, spx_p)
    return out[:, :C, :]


def sup_pix_pool(img, spx, mode="max"):
    """img: (B, C, H, W) float, spx: (B, H, W) int labels.  Returns {b: (C, K_b)}."""
    assert spx.shape[-2:] == img.shape[-2:]
    if mode not in ("max", "sum", "mean"):
        raise ValueError(f"unsupported mode {mode!r}")
    B, C, H, W = img.shape
    N = H * W
    img_flat = img.reshape(B, C, N)
    spx_flat = spx.reshape(B, N).astype(jnp.int32)

    # One device->host sync for ALL per-batch K values (the dict-of-(C, K_b)
    # contract needs static slice widths); a single Kp -> one Mosaic compile.
    Ks = jax.device_get(jnp.max(spx_flat, axis=1) + 1)
    Kmax = max(int(k) for k in Ks)
    Kp = _round_up(max(Kmax, 256), 256)                # lane-dense, MXU-N aligned

    pooled = _suppix_pool_batched(img_flat, spx_flat, Kp, mode)
    return {b: pooled[b, :, :int(Ks[b])] for b in range(B)}


def _reference_pool(img_b, spx_b, K, mode):
    # Pure-JAX reference: per-channel segment reduction.
    C = img_b.shape[0]
    data = img_b.reshape(C, -1).astype(jnp.float32)
    seg = spx_b.reshape(-1)
    if mode == "max":
        return jax.vmap(lambda d: jax.ops.segment_max(d, seg, num_segments=K))(data)
    ssum = jax.vmap(lambda d: jax.ops.segment_sum(d, seg, num_segments=K))(data)
    if mode == "sum":
        return ssum
    cnt = jax.ops.segment_sum(jnp.ones_like(seg, jnp.float32), seg, num_segments=K)
    return ssum / jnp.maximum(cnt, 1.0)


if __name__ == "__main__":
    B, C, H, W = 2, 4, 16, 16
    key = jax.random.PRNGKey(0)
    img = jax.random.normal(key, (B, C, H, W), dtype=jnp.float32)

    # Deterministic superpixel maps: batch 0 has 16 4x4 blocks, batch 1 has 4
    # 8x8 blocks (different K per batch, every label occupied).
    yy, xx = jnp.meshgrid(jnp.arange(H), jnp.arange(W), indexing="ij")
    spx0 = (yy // 4) * 4 + (xx // 4)
    spx1 = (yy // 8) * 2 + (xx // 8)
    spx = jnp.stack([spx0, spx1]).astype(jnp.int32)

    ok = True
    for mode in ("max", "mean", "sum"):
        out = sup_pix_pool(img, spx, mode=mode)
        for b in out:
            jax.block_until_ready(out[b])
        for b in range(B):
            K = int(jnp.max(spx[b])) + 1
            assert out[b].shape == (C, K)
            ref = _reference_pool(img[b], spx[b], K, mode)
            ok = ok and bool(jnp.allclose(out[b], ref, atol=1e-5, rtol=1e-5))

    print("KERNEL_OK" if ok else "MISMATCH")
</pallas_src>

<mosaic_0001>
module attributes {stable_mosaic.version = 11 : i64} {
  func.func @_suppix_pool_kernel(%arg0: i32, %arg1: i32, %arg2: i32, %arg3: memref<2x1xi32, #tpu.memory_space<smem>>, %arg4: memref<2x1xi32, #tpu.memory_space<smem>>, %arg5: memref<1x8x256xf32, #tpu.memory_space<vmem>>, %arg6: memref<1x1x256xi32, #tpu.memory_space<vmem>>, %arg7: memref<1x8x256xf32, #tpu.memory_space<vmem>>, %arg8: memref<8x256xf32, #tpu.memory_space<vmem>>) attributes {dimension_semantics = [#tpu.dimension_semantics<parallel>, #tpu.dimension_semantics<parallel>, #tpu.dimension_semantics<arbitrary>], iteration_bounds = array<i64: 2, 1, 1>, scalar_prefetch = 2 : i64, scratch_operands = 1 : i64, tpu.core_type = #tpu.core_type<tc>, window_params = [{transform_indices = @transform_0, window_bounds = array<i64: 1, 8, 256>}, {transform_indices = @transform_1, window_bounds = array<i64: 1, 1, 256>}, {transform_indices = @transform_2, window_bounds = array<i64: 1, 8, 256>}]} {
    %c0_i32 = arith.constant 0 : i32
    %0 = arith.cmpi eq, %arg2, %c0_i32 : i32
    %1 = arith.extui %0 : i1 to i32
    %c0_i32_0 = arith.constant 0 : i32
    %2 = arith.cmpi ne, %1, %c0_i32_0 : i32
    scf.if %2 {
      %cst_13 = arith.constant 0xFF800000 : f32
      %22 = vector.broadcast %cst_13 : f32 to vector<8x256xf32>
      %c0_14 = arith.constant 0 : index
      %c0_15 = arith.constant 0 : index
      %23 = vector.load %arg8[%c0_14, %c0_15] : memref<8x256xf32, #tpu.memory_space<vmem>>, vector<8x256xf32>
      tpu.vector_store %arg8[%c0_14, %c0_15], %22 {strides = array<i32>} : memref<8x256xf32, #tpu.memory_space<vmem>>, vector<8x256xf32>,
    } else {
    }
    %c0 = arith.constant 0 : index
    %c0_1 = arith.constant 0 : index
    %c0_2 = arith.constant 0 : index
    %3 = vector.load %arg5[%c0, %c0_1, %c0_2] : memref<1x8x256xf32, #tpu.memory_space<vmem>>, vector<1x8x256xf32>
    %4 = vector.shape_cast %3 : vector<1x8x256xf32> to vector<8x256xf32>
    %c0_3 = arith.constant 0 : index
    %c0_4 = arith.constant 0 : index
    %c0_5 = arith.constant 0 : index
    %5 = vector.load %arg6[%c0_3, %c0_4, %c0_5] : memref<1x1x256xi32, #tpu.memory_space<vmem>>, vector<1x1x256xi32>
    %6 = vector.shape_cast %5 : vector<1x1x256xi32> to vector<1x256xi32>
    %7 = arith.index_cast %arg0 : i32 to index
    %8 = arith.index_cast %arg2 : i32 to index
    %9 = memref.load %arg3[%7, %8] : memref<2x1xi32, #tpu.memory_space<smem>>
    %10 = arith.index_cast %arg0 : i32 to index
    %11 = arith.index_cast %arg2 : i32 to index
    %12 = memref.load %arg4[%10, %11] : memref<2x1xi32, #tpu.memory_space<smem>>
    %13 = arith.subi %12, %9 : i32
    %c1_i32 = arith.constant 1 : i32
    %c1_i32_6 = arith.constant 1 : i32
    %14 = arith.subi %c1_i32, %c1_i32_6 : i32
    %15 = arith.addi %13, %14 : i32
    %c1_i32_7 = arith.constant 1 : i32
    %16 = arith.divsi %15, %c1_i32_7 : i32
    %c1_i32_8 = arith.constant 1 : i32
    %cst = arith.constant 0xFF800000 : f32
    %c0_i32_9 = arith.constant 0 : i32
    %17 = arith.subi %16, %c0_i32_9 : i32
    %18 = arith.addi %c0_i32_9, %17 : i32
    %c1_i32_10 = arith.constant 1 : i32
    scf.for %arg9 = %c0_i32_9 to %18 step %c1_i32_10  : i32 {
      %22 = arith.muli %arg9, %c1_i32_8 : i32
      %23 = arith.addi %9, %22 : i32
      %c128_i32 = arith.constant 128 : i32
      %24 = arith.muli %23, %c128_i32 : i32
      %25 = tpu.iota {dimensions = array<i32: 0>} : vector<128x256xi32>
      %26 = vector.broadcast %24 : i32 to vector<128x256xi32>
      %27 = arith.addi %25, %26 : vector<128x256xi32>
      %28 = vector.broadcast %6 : vector<1x256xi32> to vector<128x256xi32>
      %29 = arith.cmpi eq, %28, %27 : vector<128x256xi32>
      %30 = vector.shape_cast %29 : vector<128x256xi1> to vector<1x128x256xi1>
      %31 = vector.shape_cast %4 : vector<8x256xf32> to vector<8x1x256xf32>
      %32 = vector.shape_cast %30 : vector<1x128x256xi1> to vector<1x128x256xi1>
      %33 = vector.broadcast %32 : vector<1x128x256xi1> to vector<8x128x256xi1>
      %34 = vector.shape_cast %31 : vector<8x1x256xf32> to vector<8x1x256xf32>
      %35 = vector.broadcast %34 : vector<8x1x256xf32> to vector<8x128x256xf32>
      %36 = vector.broadcast %cst : f32 to vector<8x128x256xf32>
      %37 = arith.select %33, %35, %36 : vector<8x128x256xi1>, vector<8x128x256xf32>
      %cst_13 = arith.constant dense<0xFF800000> : vector<8x128xf32>
      %38 = vector.multi_reduction <maximumf>, %37, %cst_13 [2] : vector<8x128x256xf32> to vector<8x128xf32>
      %39 = tpu.assume_multiple %24, 128 : i32
      %c0_14 = arith.constant 0 : index
      %40 = arith.index_cast %39 : i32 to index
      %41 = vector.load %arg8[%c0_14, %40] : memref<8x256xf32, #tpu.memory_space<vmem>>, vector<8x128xf32>
      %42 = arith.maximumf %41, %38 : vector<8x128xf32>
      %c0_15 = arith.constant 0 : index
      %43 = arith.index_cast %39 : i32 to index
      %44 = vector.load %arg8[%c0_15, %43] : memref<8x256xf32, #tpu.memory_space<vmem>>, vector<8x128xf32>
      tpu.vector_store %arg8[%c0_15, %43], %42 {strides = array<i32>} : memref<8x256xf32, #tpu.memory_space<vmem>>, vector<8x128xf32>,
    }
    %c0_i32_11 = arith.constant 0 : i32
    %19 = arith.cmpi eq, %arg2, %c0_i32_11 : i32
    %20 = arith.extui %19 : i1 to i32
    %c0_i32_12 = arith.constant 0 : i32
    %21 = arith.cmpi ne, %20, %c0_i32_12 : i32
    scf.if %21 {
      %c0_13 = arith.constant 0 : index
      %c0_14 = arith.constant 0 : index
      %22 = vector.load %arg8[%c0_13, %c0_14] : memref<8x256xf32, #tpu.memory_space<vmem>>, vector<8x256xf32>
      %cst_15 = arith.constant 0xFF800000 : f32
      %23 = vector.broadcast %cst_15 : f32 to vector<8x256xf32>
      %24 = arith.cmpf ogt, %22, %23 : vector<8x256xf32>
      %cst_16 = arith.constant 0.000000e+00 : f32
      %25 = vector.broadcast %cst_16 : f32 to vector<8x256xf32>
      %26 = arith.select %24, %22, %25 : vector<8x256xi1>, vector<8x256xf32>
      %c0_17 = arith.constant 0 : index
      %c0_18 = arith.constant 0 : index
      %c0_19 = arith.constant 0 : index
      %27 = vector.load %arg7[%c0_17, %c0_18, %c0_19] : memref<1x8x256xf32, #tpu.memory_space<vmem>>, vector<1x8x256xf32>
      %28 = vector.shape_cast %27 : vector<1x8x256xf32> to vector<8x256xf32>
      %29 = vector.shape_cast %26 : vector<8x256xf32> to vector<1x8x256xf32>
      tpu.vector_store %arg7[%c0_17, %c0_18, %c0_19], %29 {strides = array<i32>} : memref<1x8x256xf32, #tpu.memory_space<vmem>>, vector<1x8x256xf32>,
    } else {
    }
    return
  }
  func.func @transform_0(%arg0: i32, %arg1: i32, %arg2: i32, %arg3: memref<2x1xi32, #tpu.memory_space<smem>>, %arg4: memref<2x1xi32, #tpu.memory_space<smem>>) -> (i32, i32, i32) {
    %c0_i32 = arith.constant 0 : i32
    return %arg0, %arg1, %arg2 : i32, i32, i32
  }
  func.func @transform_1(%arg0: i32, %arg1: i32, %arg2: i32, %arg3: memref<2x1xi32, #tpu.memory_space<smem>>, %arg4: memref<2x1xi32, #tpu.memory_space<smem>>) -> (i32, i32, i32) {
    %c0_i32 = arith.constant 0 : i32
    %c0_i32_0 = arith.constant 0 : i32
    return %arg0, %c0_i32, %arg2 : i32, i32, i32
  }
  func.func @transform_2(%arg0: i32, %arg1: i32, %arg2: i32, %arg3: memref<2x1xi32, #tpu.memory_space<smem>>, %arg4: memref<2x1xi32, #tpu.memory_space<smem>>) -> (i32, i32, i32) {
    %c0_i32 = arith.constant 0 : i32
    %c0_i32_0 = arith.constant 0 : i32
    return %arg0, %arg1, %c0_i32 : i32, i32, i32
  }
}

</mosaic_0001>

<llo_original>
// kernel: tpu_custom_call.1
$region0: #{tpu_custom_call.1}
  #allocation0 [shape = 'u32[]', space=smem, size = 0x4, offset = 0x4, fixed_abs, tag = 'smem constant byte address 0x4 - core index']
  #allocation1 [shape = 'u32[144,128]{1,0:T(1,128)}', space=vmem, size = 0x12000, scoped, tag = 'internal scratch']
  #allocation2 [shape = 'f32[8,256]{1,0:T(8,128)}', space=vmem, size = 0x2000, scoped, tag = 'scratch operand']
  #allocation3 [shape = 's32[1]{0}', space=sflag, size = 0x4, scoped, tag = 'scoped memory for tpu_custom_call.1']
  #allocation4 [shape = 'u8[1024]{0}', space=smem, size = 0x400, scoped, tag = 'prefetched SMEM operand 0']
  #allocation5 [shape = 'u8[1024]{0}', space=smem, size = 0x400, scoped, tag = 'prefetched SMEM operand 1']
  %s0 = inlined_call_operand.vmem [shape: s32[2,1], index: 0, kind: input, shape index: {}]
  %s1 = inlined_call_operand.vmem [shape: s32[2,1], index: 1, kind: input, shape index: {}]
  %s2 = inlined_call_operand.hbm [shape: f32[2,8,256], index: 2, kind: input, shape index: {}]
  %s3 = inlined_call_operand.vmem [shape: s32[2,1,256], index: 3, kind: input, shape index: {}]
  %s4 = inlined_call_operand.hbm [shape: f32[2,8,256], index: 4, kind: output, shape index: {}]
  %s5 = sld [smem:[#allocation0]]
  $region60: #{tpu_custom_call.1} parent=0
    _
  %s7 = ssub.s32 1, %s5
  %s8 = scalar_select 0, %s7, %s5
  %s9 = sshll.u32 %s0, 4
  %s10 = int_to_ptr.vmem [resolvable:$true] %s9
  %12 = dma.vmem_to_smem %s10, 32, [#allocation4], [#allocation3]
  %s13 = sshll.u32 %s1, 4
  %s14 = int_to_ptr.vmem [resolvable:$true] %s13
  %16 = dma.vmem_to_smem %s14, 32, [#allocation5], [#allocation3]
  %17 = dma.done [#allocation3], 64
  %18 = sfence
  $region1: #{tpu_custom_call.1} parent=0
    #allocation6 [shape = 'u8[16384]{0}', space=vmem, size = 0x4000, scoped, tag = 'input window, operand 2']
    #allocation7 [shape = 's32[2]{0}', space=sflag, size = 0x8, scoped, tag = 'scoped memory for tpu_custom_call.1']
    #allocation8 [shape = 's32[2]{0}', space=sflag, size = 0x8, scoped, tag = 'scoped memory for tpu_custom_call.1']
    #allocation9 [shape = 'u8[16384]{0}', space=vmem, size = 0x4000, scoped, tag = 'output window, operand 0']
    %19 = vsyncpa [#allocation7], 0
    %s20 = scalar_lea.sflag [#allocation7], 1
    %21 = vsyncpa %s20, 0
    %22 = vsyncpa [#allocation8], 0
    %s23 = scalar_lea.sflag [#allocation8], 1
    %24 = vsyncpa %s23, 0
    loop: start=0, step=1, limit=4
    $region2: #{tpu_custom_call.1} parent=1 // loop_pre_header
      _
    $region3: #{tpu_custom_call.1} parent=1 // loop_header
      %s26 = sphi 0, %s30
      %p27 = scmp.ge.s32.totalorder %s26, 4
      %s33 = sphi 0, %s52
      %s34 = sphi 0, %s48
      %s35 = sphi 0, %s44
      %s36 = sphi 0, %s33
      %s37 = sphi 0, %s34
      %s38 = sphi 0, %s35
      %s39 = sphi 0, %s36
      %s40 = sphi 0, %s37
      %s41 = sphi 0, %s38
      %s59 = sphi 0, %s61
      %s62 = sphi 0, %s59
      %s63 = sphi 0, %s62
      %s79 = sphi 0, %s63
      %s87 = sphi 0, %s89
      %s90 = sphi 0, %s87
      %s91 = sphi 0, %s90
      %s107 = sphi 0, %s91
      %s115 = sphi 0, %s117
      %s118 = sphi 0, %s115
      %s119 = sphi 0, %s118
      %s135 = sphi 0, %s119
    $region4: #{tpu_custom_call.1} parent=1 // loop_header_branch
      %29 = sbr.rel (%p27) target = $region8
    $region5: #{tpu_custom_call.1} parent=1 // loop_body
      %s31 = ssub.s32 %s26, 1
      %s32 = ssub.s32 %s26, 2
      %s42 = sadd.s32 1, %s35
      %p43 = scmp.ge.s32.totalorder %s42, 1
      %s44 = scalar_select %p43, 0, %s42
      %s45 = sadd.s32 1, %s34
      %s46 = scalar_select %p43, %s45, %s34
      %p47 = scmp.ge.s32.totalorder %s46, 1
      %s48 = scalar_select %p47, 0, %s46
      %s49 = sadd.s32 1, %s33
      %s50 = scalar_select %p47, %s49, %s33
      %p51 = scmp.ge.s32.totalorder %s50, 2
      %s52 = scalar_select %p51, 0, %s50
      %s53 = ssub.s32 %s33, %s52
      %s54 = ssub.s32 %s34, %s48
      %s55 = sor.u32 %s53, %s54
      %s56 = ssub.s32 %s35, %s44
      %s57 = sor.u32 %s55, %s56
      %p58 = scmp.eq.s32.totalorder %s57, 0
      %s60 = sadd.s32 %s59, 1
      %s61 = scalar_select %p58, %s59, %s60
      %p64 = pneg %p58
      %p65 = scmp.eq.s32.totalorder %s26, 1
      %p66 = por %p64, %p65
      %p67 = scmp.ne.s32.totalorder %s59, %s62
      %p68 = scmp.eq.s32.totalorder %s26, 0
      %p69 = por %p67, %p68
      %p70 = scmp.ne.s32.totalorder %s59, %s62
      %p71 = scmp.eq.s32.totalorder %s31, 1
      %p72 = por %p70, %p71
      %p73 = scmp.ne.s32.totalorder %s62, %s63
      %p74 = scmp.eq.s32.totalorder %s31, 0
      %p75 = por %p73, %p74
      %p76 = scmp.ne.s32.totalorder %s62, %s63
      %p77 = scmp.eq.s32.totalorder %s32, 1
      %p78 = por %p76, %p77
      %p80 = scmp.ne.s32.totalorder %s63, %s79
      %p81 = scmp.eq.s32.totalorder %s32, 0
      %p82 = por %p80, %p81
      %s83 = ssub.s32 %s33, %s52
      %s84 = ssub.s32 %s35, %s44
      %s85 = sor.u32 %s83, %s84
      %p86 = scmp.eq.s32.totalorder %s85, 0
      %s88 = sadd.s32 %s87, 1
      %s89 = scalar_select %p86, %s87, %s88
      %p92 = pneg %p86
      %p93 = scmp.eq.s32.totalorder %s26, 1
      %p94 = por %p92, %p93
      %p95 = scmp.ne.s32.totalorder %s87, %s90
      %p96 = scmp.eq.s32.totalorder %s26, 0
      %p97 = por %p95, %p96
      %p98 = scmp.ne.s32.totalorder %s87, %s90
      %p99 = scmp.eq.s32.totalorder %s31, 1
      %p100 = por %p98, %p99
      %p101 = scmp.ne.s32.totalorder %s90, %s91
      %p102 = scmp.eq.s32.totalorder %s31, 0
      %p103 = por %p101, %p102
      %p104 = scmp.ne.s32.totalorder %s90, %s91
      %p105 = scmp.eq.s32.totalorder %s32, 1
      %p106 = por %p104, %p105
      %p108 = scmp.ne.s32.totalorder %s91, %s107
      %p109 = scmp.eq.s32.totalorder %s32, 0
      %p110 = por %p108, %p109
      %s111 = ssub.s32 %s33, %s52
      %s112 = ssub.s32 %s34, %s48
      %s113 = sor.u32 %s111, %s112
      %p114 = scmp.eq.s32.totalorder %s113, 0
      %s116 = sadd.s32 %s115, 1
      %s117 = scalar_select %p114, %s115, %s116
      %p120 = pneg %p114
      %p121 = scmp.eq.s32.totalorder %s26, 1
      %p122 = por %p120, %p121
      %p123 = scmp.ne.s32.totalorder %s115, %s118
      %p124 = scmp.eq.s32.totalorder %s26, 0
      %p125 = por %p123, %p124
      %p126 = scmp.ne.s32.totalorder %s115, %s118
      %p127 = scmp.eq.s32.totalorder %s31, 1
      %p128 = por %p126, %p127
      %p129 = scmp.ne.s32.totalorder %s118, %s119
      %p130 = scmp.eq.s32.totalorder %s31, 0
      %p131 = por %p129, %p130
      %p132 = scmp.ne.s32.totalorder %s118, %s119
      %p133 = scmp.eq.s32.totalorder %s32, 1
      %p134 = por %p132, %p133
      %p136 = scmp.ne.s32.totalorder %s119, %s135
      %p137 = scmp.eq.s32.totalorder %s32, 0
      %p138 = por %p136, %p137
      %p139 = scmp.le.s32.totalorder 1, %s26
      %p140 = scmp.lt.s32.totalorder %s26, 3
      %p141 = pnand %p139, %p140
      %p142 = pneg %p141
      // Predicated region
      $region9: #{tpu_custom_call.1} parent=5 // pred_check
        _
      $region10: #{tpu_custom_call.1} parent=5 // pred_check_branch
        %144 = sbr.rel (%p141) target = $region12
      $region11: #{tpu_custom_call.1} parent=5 // pred_region
        %s145 = ssub.s32 %s26, 1
      $region12: #{tpu_custom_call.1} parent=5 // pred_fallthru
        _
      %p146 = scmp.lt.s32.totalorder %s26, 2
      // Predicated region
      $region13: #{tpu_custom_call.1} parent=5 // pred_check
        %p147 = pneg %p146
      $region14: #{tpu_custom_call.1} parent=5 // pred_check_branch
        %149 = sbr.rel (%p147) target = $region16
      $region15: #{tpu_custom_call.1} parent=5 // pred_region
        // Predicated region
        $region17: #{tpu_custom_call.1} parent=15 // pred_check
          %p150 = pneg %p69
        $region18: #{tpu_custom_call.1} parent=15 // pred_check_branch
          %152 = sbr.rel (%p150) target = $region20
        $region19: #{tpu_custom_call.1} parent=15 // pred_region
          %s153 = sand.u32 %s59, 1
          %s154 = scalar_lea.sflag [#allocation7], %s153
          %s155 = sand.u32 %s59, 1
          %s156 = smul.addr %s155, 16
          %s157 = scalar_lea.vmem [#allocation6], %s156
          %s158 = smul.u32 2, %s35
          %s160 = ssub.s32 256, 256
          %161 = vsyncadd %s154, %s160
          %s162 = smul.addr %s34, 2
          %s163 = sadd.s32 %s158, %s162
          %s164 = smul.addr %s33, 2
          %s165 = sadd.s32 %s163, %s164
          %s166 = smul.addr %s165, 128
          %s167 = scalar_lea.hbm %s2, %s166
          %s169 = sshll.u32 %s157, 4
          %s170 = int_to_ptr.vmem [resolvable:$true] %s169
          %172 = dma.hbm_to_vmem [thread:$0]  %s167, 256, %s170, %s154
        $region20: #{tpu_custom_call.1} parent=15 // pred_fallthru
          _
        // Predicated region
        $region21: #{tpu_custom_call.1} parent=15 // pred_check
          %p173 = pneg %p97
        $region22: #{tpu_custom_call.1} parent=15 // pred_check_branch
          %175 = sbr.rel (%p173) target = $region24
        $region23: #{tpu_custom_call.1} parent=15 // pred_region
          %s176 = smul.u32 2, %s35
          %p177 = scmp.lt.s32.totalorder %s33, 1
          %s178 = scalar_select %p177, %s33, 1
          %p179 = scmp.lt.s32.totalorder %s176, 1
          %s180 = scalar_select %p179, %s176, 1
          %s181 = smul.addr %s178, 2
          %s182 = sadd.s32 %s180, %s181
          %s183 = scalar_lea.vmem %s3, %s182
          %s184 = smul.u32 2, %s35
        $region24: #{tpu_custom_call.1} parent=15 // pred_fallthru
          _
      $region16: #{tpu_custom_call.1} parent=5 // pred_fallthru
        _
      %p185 = scmp.le.s32.totalorder 1, %s26
      %p186 = scmp.lt.s32.totalorder %s26, 3
      %p187 = pnand %p185, %p186
      %p188 = pneg %p187
      // Predicated region
      $region25: #{tpu_custom_call.1} parent=5 // pred_check
        _
      $region26: #{tpu_custom_call.1} parent=5 // pred_check_branch
        %190 = sbr.rel (%p187) target = $region28
      $region27: #{tpu_custom_call.1} parent=5 // pred_region
        %s191 = ssub.s32 %s26, 1
        %s192 = sand.u32 %s62, 1
        %s193 = scalar_lea.sflag [#allocation7], %s192
        %s194 = sand.u32 %s62, 1
        %s195 = smul.addr %s194, 16
        %s196 = scalar_lea.vmem [#allocation6], %s195
        // Predicated region
        $region29: #{tpu_custom_call.1} parent=27 // pred_check
          %p197 = pneg %p75
        $region30: #{tpu_custom_call.1} parent=27 // pred_check_branch
          %199 = sbr.rel (%p197) target = $region32
        $region31: #{tpu_custom_call.1} parent=27 // pred_region
          %200 = dma.done %s193, 256
        $region32: #{tpu_custom_call.1} parent=27 // pred_fallthru
          _
        %s201 = sand.u32 %s62, 1
        %s202 = scalar_lea.sflag [#allocation7], %s201
        %s203 = sand.u32 %s62, 1
        %s204 = smul.addr %s203, 16
        %s205 = scalar_lea.vmem [#allocation6], %s204
        %p206 = pneg %p75
        %p207 = pneg %p72
        %s208 = smul.u32 2, %s38
        %p209 = scmp.lt.s32.totalorder %s36, 1
        %s210 = scalar_select %p209, %s36, 1
        %p211 = scmp.lt.s32.totalorder %s208, 1
        %s212 = scalar_select %p211, %s208, 1
        %s213 = smul.addr %s210, 2
        %s214 = sadd.s32 %s212, %s213
        %s215 = scalar_lea.vmem %s3, %s214
        %p216 = pneg %p103
        %p217 = pneg %p100
        %p218 = pneg %p131
        %p219 = pneg %p128
        %s220 = sand.u32 %s118, 1
        %s221 = scalar_lea.sflag [#allocation8], %s220
        %s222 = sand.u32 %s118, 1
        %s223 = smul.addr %s222, 16
        %s224 = scalar_lea.vmem [#allocation9], %s223
        %s225 = smul.u32 2, %s38
        %s226 = smul.u32 2, %s38
        %p227 = scmp.lt.s32.totalorder %s36, 1
        %s228 = scalar_select %p227, %s36, 1
        %p229 = scmp.lt.s32.totalorder %s226, 1
        %s230 = scalar_select %p229, %s226, 1
        %s231 = smul.addr %s228, 2
        %s232 = sadd.s32 %s230, %s231
        %s233 = scalar_lea.vmem %s3, %s232
        %s234 = smul.u32 2, %s38
        %p235 = scmp.eq.s32.totalorder %s38, 0
        // Predicated region
        $region33: #{tpu_custom_call.1} parent=27 // pred_check
          %p236 = pneg %p235
        $region34: #{tpu_custom_call.1} parent=27 // pred_check_branch
          %238 = sbr.rel (%p236) target = $region36
        $region35: #{tpu_custom_call.1} parent=27 // pred_region
          %239 = vst [vmem:[#allocation2] sm:$0xff] -inf
          %240 = vst [vmem:[#allocation2 + $0x8] sm:$0xff] -inf
        $region36: #{tpu_custom_call.1} parent=27 // pred_fallthru
          _
        %v241 = vld [vmem:[%s196] sm:$0xff]
        %v242 = vld [vmem:[%s196 + $0x8] sm:$0xff]
        %v243 = vld [vmem:[%s233] sm:$0x3]
        %s244 = sshra.s32 %s38, 7
        %s245 = sand.u32 %s38, 127
        %s246 = sadd.s32 %s244, %s36
        %s247 = smul.u32 %s246, 128
        %s248 = sshra.s32 %s38, 7
        %s249 = sand.u32 %s38, 127
        %s250 = sadd.s32 %s247, %s249
        %s251 = sld [smem:[#allocation4 + %s250]]
        %s252 = sld [smem:[#allocation5 + %s250]]
        %s253 = ssub.s32 %s252, %s251
        // While loop
        $region37: #{tpu_custom_call.1} parent=27 // loop_pre_header
          _
        $region38: #{tpu_custom_call.1} parent=27 // loop_header
          %s255 = sphi 0, %s257
          %p256 = scmp.ge.s32.totalorder %s255, %s253
        $region39: #{tpu_custom_call.1} parent=27 // loop_header_branch
          %259 = sbr.rel (%p256) target = $region43
        $region40: #{tpu_custom_call.1} parent=27 // loop_body
          %s260 = sadd.s32 %s251, %s255
          %s261 = smul.u32 %s260, 128
          %v262 = vlaneseq
          %v263 = vshrl.u32 %v262, 7
          %v264 = vadd.s32 %v263, 8
          %v265 = vadd.s32 %v263, 16
          %v266 = vadd.s32 %v263, 24
          %v267 = vadd.s32 %v263, 32
          %v268 = vadd.s32 %v263, 40
          %v269 = vadd.s32 %v263, 48
          %v270 = vadd.s32 %v263, 56
          %v271 = vadd.s32 %v263, 64
          %v272 = vadd.s32 %v263, 72
          %v273 = vadd.s32 %v263, 80
          %v274 = vadd.s32 %v263, 88
          %v275 = vadd.s32 %v263, 96
          %v276 = vadd.s32 %v263, 104
          %v277 = vadd.s32 %v263, 112
          %v278 = vadd.s32 %v263, 120
          %v279 = vstv %s261
          %v280 = vadd.s32 %v263, %v279
          %v281 = vadd.s32 %v264, %v279
          %v282 = vadd.s32 %v265, %v279
          %v283 = vadd.s32 %v266, %v279
          %v284 = vadd.s32 %v267, %v279
          %v285 = vadd.s32 %v268, %v279
          %v286 = vadd.s32 %v269, %v279
          %v287 = vadd.s32 %v270, %v279
          %v288 = vadd.s32 %v271, %v279
          %v289 = vadd.s32 %v272, %v279
          %v290 = vadd.s32 %v273, %v279
          %v291 = vadd.s32 %v274, %v279
          %v292 = vadd.s32 %v275, %v279
          %v293 = vadd.s32 %v276, %v279
          %v294 = vadd.s32 %v277, %v279
          %v295 = vadd.s32 %v278, %v279
          %v296 = vlaneseq
          %v297 = vshrl.u32 %v296, 7
          %v298 = vsub.s32 0, %v297
          %v299 = vrot.slane %v243, %v298
          %v300 = vlaneseq
          %v301 = vshrl.u32 %v300, 7
          %v302 = vsub.s32 1, %v301
          %v303 = vrot.slane %v243, %v302
          %vm304 = vcmp.eq.s32.totalorder %v299, %v280
          %vm305 = vcmp.eq.s32.totalorder %v303, %v280
          %vm306 = vcmp.eq.s32.totalorder %v299, %v281
          %vm307 = vcmp.eq.s32.totalorder %v303, %v281
          %vm308 = vcmp.eq.s32.totalorder %v299, %v282
          %vm309 = vcmp.eq.s32.totalorder %v303, %v282
          %vm310 = vcmp.eq.s32.totalorder %v299, %v283
          %vm311 = vcmp.eq.s32.totalorder %v303, %v283
          %vm312 = vcmp.eq.s32.totalorder %v299, %v284
          %vm313 = vcmp.eq.s32.totalorder %v303, %v284
          %vm314 = vcmp.eq.s32.totalorder %v299, %v285
          %vm315 = vcmp.eq.s32.totalorder %v303, %v285
          %vm316 = vcmp.eq.s32.totalorder %v299, %v286
          %vm317 = vcmp.eq.s32.totalorder %v303, %v286
          %vm318 = vcmp.eq.s32.totalorder %v299, %v287
          %vm319 = vcmp.eq.s32.totalorder %v303, %v287
          %vm320 = vcmp.eq.s32.totalorder %v299, %v288
          %vm321 = vcmp.eq.s32.totalorder %v303, %v288
          %vm322 = vcmp.eq.s32.totalorder %v299, %v289
          %vm323 = vcmp.eq.s32.totalorder %v303, %v289
          %vm324 = vcmp.eq.s32.totalorder %v299, %v290
          %vm325 = vcmp.eq.s32.totalorder %v303, %v290
          %vm326 = vcmp.eq.s32.totalorder %v299, %v291
          %vm327 = vcmp.eq.s32.totalorder %v303, %v291
          %vm328 = vcmp.eq.s32.totalorder %v299, %v292
          %vm329 = vcmp.eq.s32.totalorder %v303, %v292
          %vm330 = vcmp.eq.s32.totalorder %v299, %v293
          %vm331 = vcmp.eq.s32.totalorder %v303, %v293
          %vm332 = vcmp.eq.s32.totalorder %v299, %v294
          %vm333 = vcmp.eq.s32.totalorder %v303, %v294
          %vm334 = vcmp.eq.s32.totalorder %v299, %v295
          %vm335 = vcmp.eq.s32.totalorder %v303, %v295
          %v338 = vcombine.low %v241, %v242
          %v339 = vcombine.high %v241, %v242
          %v341 = vunpack.c.l.s4 1966171168
          %v342 = vunpack.c.0.s8 %v341
          %v343 = vlaneseq
          %v344 = vshrl.u32 %v343, 7
          %v345 = vsub.s32 %v342, %v344
          %v346 = vrot.slane %v338, %v345
          %v348 = vunpack.c.l.s4 1966171168
          %v349 = vunpack.c.0.s8 %v348
          %v350 = vlaneseq
          %v351 = vshrl.u32 %v350, 7
          %v352 = vsub.s32 %v349, %v351
          %v353 = vrot.slane %v339, %v352
          %v354 = vcombine.high %v346, %v346
          %v355 = vcombine.high %v353, %v353
          %v357 = vunpack.c.l.s4 1966171168
          %v358 = vunpack.c.0.s8 %v357
          %v359 = vlaneseq
          %v360 = vshrl.u32 %v359, 7
          %v361 = vsub.s32 %v358, %v360
          %v362 = vrot.slane %v346, %v361
          %v364 = vunpack.c.l.s4 1966171168
          %v365 = vunpack.c.0.s8 %v364
          %v366 = vlaneseq
          %v367 = vshrl.u32 %v366, 7
          %v368 = vsub.s32 %v365, %v367
          %v369 = vrot.slane %v353, %v368
          %v371 = vunpack.c.l.s4 1966171168
          %v372 = vunpack.c.0.s8 %v371
          %v373 = vlaneseq
          %v374 = vshrl.u32 %v373, 7
          %v375 = vsub.s32 %v372, %v374
          %v376 = vrot.slane %v354, %v375
          %v378 = vunpack.c.l.s4 1966171168
          %v379 = vunpack.c.0.s8 %v378
          %v380 = vlaneseq
          %v381 = vshrl.u32 %v380, 7
          %v382 = vsub.s32 %v379, %v381
          %v383 = vrot.slane %v355, %v382
          %v384 = vcombine.high %v362, %v362
          %v385 = vcombine.high %v369, %v369
          %v386 = vcombine.high %v376, %v376
          %v387 = vcombine.high %v383, %v383
          %v388 = vsel %vm304, 1, 0
          %v389 = vsel %vm305, 1, 0
          %v390 = vsel %vm306, 1, 0
          %v391 = vsel %vm307, 1, 0
          %v392 = vsel %vm308, 1, 0
          %v393 = vsel %vm309, 1, 0
          %v394 = vsel %vm310, 1, 0
          %v395 = vsel %vm311, 1, 0
          %v396 = vsel %vm312, 1, 0
          %v397 = vsel %vm313, 1, 0
          %v398 = vsel %vm314, 1, 0
          %v399 = vsel %vm315, 1, 0
          %v400 = vsel %vm316, 1, 0
          %v401 = vsel %vm317, 1, 0
          %v402 = vsel %vm318, 1, 0
          %v403 = vsel %vm319, 1, 0
          %v404 = vsel %vm320, 1, 0
          %v405 = vsel %vm321, 1, 0
          %v406 = vsel %vm322, 1, 0
          %v407 = vsel %vm323, 1, 0
          %v408 = vsel %vm324, 1, 0
          %v409 = vsel %vm325, 1, 0
          %v410 = vsel %vm326, 1, 0
          %v411 = vsel %vm327, 1, 0
          %v412 = vsel %vm328, 1, 0
          %v413 = vsel %vm329, 1, 0
          %v414 = vsel %vm330, 1, 0
          %v415 = vsel %vm331, 1, 0
          %v416 = vsel %vm332, 1, 0
          %v417 = vsel %vm333, 1, 0
          %v418 = vsel %vm334, 1, 0
          %v419 = vsel %vm335, 1, 0
          %vm420 = vcmp.eq.s32.totalorder %v388, 1
          %vm421 = vcmp.eq.s32.totalorder %v389, 1
          %vm422 = vcmp.eq.s32.totalorder %v390, 1
          %vm423 = vcmp.eq.s32.totalorder %v391, 1
          %vm424 = vcmp.eq.s32.totalorder %v392, 1
          %vm425 = vcmp.eq.s32.totalorder %v393, 1
          %vm426 = vcmp.eq.s32.totalorder %v394, 1
          %vm427 = vcmp.eq.s32.totalorder %v395, 1
          %vm428 = vcmp.eq.s32.totalorder %v396, 1
          %vm429 = vcmp.eq.s32.totalorder %v397, 1
          %vm430 = vcmp.eq.s32.totalorder %v398, 1
          %vm431 = vcmp.eq.s32.totalorder %v399, 1
          %vm432 = vcmp.eq.s32.totalorder %v400, 1
          %vm433 = vcmp.eq.s32.totalorder %v401, 1
          %vm434 = vcmp.eq.s32.totalorder %v402, 1
          %vm435 = vcmp.eq.s32.totalorder %v403, 1
          %vm436 = vcmp.eq.s32.totalorder %v404, 1
          %vm437 = vcmp.eq.s32.totalorder %v405, 1
          %vm438 = vcmp.eq.s32.totalorder %v406, 1
          %vm439 = vcmp.eq.s32.totalorder %v407, 1
          %vm440 = vcmp.eq.s32.totalorder %v408, 1
          %vm441 = vcmp.eq.s32.totalorder %v409, 1
          %vm442 = vcmp.eq.s32.totalorder %v410, 1
          %vm443 = vcmp.eq.s32.totalorder %v411, 1
          %vm444 = vcmp.eq.s32.totalorder %v412, 1
          %vm445 = vcmp.eq.s32.totalorder %v413, 1
          %vm446 = vcmp.eq.s32.totalorder %v414, 1
          %vm447 = vcmp.eq.s32.totalorder %v415, 1
          %vm448 = vcmp.eq.s32.totalorder %v416, 1
          %vm449 = vcmp.eq.s32.totalorder %v417, 1
          %vm450 = vcmp.eq.s32.totalorder %v418, 1
          %vm451 = vcmp.eq.s32.totalorder %v419, 1
          %v452 = vlaneseq
          %v453 = vshrl.u32 %v452, 7
          %v454 = vsub.s32 0, %v453
          %v455 = vrot.slane %v362, %v454
          %v456 = vlaneseq
          %v457 = vshrl.u32 %v456, 7
          %v458 = vsub.s32 1, %v457
          %v459 = vrot.slane %v362, %v458
          %v460 = vlaneseq
          %v461 = vshrl.u32 %v460, 7
          %v462 = vsub.s32 0, %v461
          %v463 = vrot.slane %v376, %v462
          %v464 = vlaneseq
          %v465 = vshrl.u32 %v464, 7
          %v466 = vsub.s32 1, %v465
          %v467 = vrot.slane %v376, %v466
          %v468 = vlaneseq
          %v469 = vshrl.u32 %v468, 7
          %v470 = vsub.s32 0, %v469
          %v471 = vrot.slane %v384, %v470
          %v472 = vlaneseq
          %v473 = vshrl.u32 %v472, 7
          %v474 = vsub.s32 1, %v473
          %v475 = vrot.slane %v384, %v474
          %v476 = vlaneseq
          %v477 = vshrl.u32 %v476, 7
          %v478 = vsub.s32 0, %v477
          %v479 = vrot.slane %v386, %v478
          %v480 = vlaneseq
          %v481 = vshrl.u32 %v480, 7
          %v482 = vsub.s32 1, %v481
          %v483 = vrot.slane %v386, %v482
          %v484 = vlaneseq
          %v485 = vshrl.u32 %v484, 7
          %v486 = vsub.s32 0, %v485
          %v487 = vrot.slane %v369, %v486
          %v488 = vlaneseq
          %v489 = vshrl.u32 %v488, 7
          %v490 = vsub.s32 1, %v489
          %v491 = vrot.slane %v369, %v490
          %v492 = vlaneseq
          %v493 = vshrl.u32 %v492, 7
          %v494 = vsub.s32 0, %v493
          %v495 = vrot.slane %v383, %v494
          %v496 = vlaneseq
          %v497 = vshrl.u32 %v496, 7
          %v498 = vsub.s32 1, %v497
          %v499 = vrot.slane %v383, %v498
          %v500 = vlaneseq
          %v501 = vshrl.u32 %v500, 7
          %v502 = vsub.s32 0, %v501
          %v503 = vrot.slane %v385, %v502
          %v504 = vlaneseq
          %v505 = vshrl.u32 %v504, 7
          %v506 = vsub.s32 1, %v505
          %v507 = vrot.slane %v385, %v506
          %v508 = vlaneseq
          %v509 = vshrl.u32 %v508, 7
          %v510 = vsub.s32 0, %v509
          %v511 = vrot.slane %v387, %v510
          %v512 = vlaneseq
          %v513 = vshrl.u32 %v512, 7
          %v514 = vsub.s32 1, %v513
          %v515 = vrot.slane %v387, %v514
          %v532 = vsel %vm420, %v455, -inf
          %v533 = vsel %vm421, %v459, -inf
          %v534 = vsel %vm422, %v455, -inf
          %v535 = vsel %vm423, %v459, -inf
          %v536 = vsel %vm424, %v455, -inf
          %v537 = vsel %vm425, %v459, -inf
          %v538 = vsel %vm426, %v455, -inf
          %v539 = vsel %vm427, %v459, -inf
          %v540 = vsel %vm428, %v455, -inf
          %v541 = vsel %vm429, %v459, -inf
          %v542 = vsel %vm430, %v455, -inf
          %v543 = vsel %vm431, %v459, -inf
          %v544 = vsel %vm432, %v455, -inf
          %v545 = vsel %vm433, %v459, -inf
          %v546 = vsel %vm434, %v455, -inf
          %v547 = vsel %vm435, %v459, -inf
          %v548 = vsel %vm436, %v455, -inf
          %v549 = vsel %vm437, %v459, -inf
          %v550 = vsel %vm438, %v455, -inf
          %v551 = vsel %vm439, %v459, -inf
          %v552 = vsel %vm440, %v455, -inf
          %v553 = vsel %vm441, %v459, -inf
          %v554 = vsel %vm442, %v455, -inf
          %v555 = vsel %vm443, %v459, -inf
          %v556 = vsel %vm444, %v455, -inf
          %v557 = vsel %vm445, %v459, -inf
          %v558 = vsel %vm446, %v455, -inf
          %v559 = vsel %vm447, %v459, -inf
          %v560 = vsel %vm448, %v455, -inf
          %v561 = vsel %vm449, %v459, -inf
          %v562 = vsel %vm450, %v455, -inf
          %v563 = vsel %vm451, %v459, -inf
          %v564 = vsel %vm420, %v463, -inf
          %v565 = vsel %vm421, %v467, -inf
          %v566 = vsel %vm422, %v463, -inf
          %v567 = vsel %vm423, %v467, -inf
          %v568 = vsel %vm424, %v463, -inf
          %v569 = vsel %vm425, %v467, -inf
          %v570 = vsel %vm426, %v463, -inf
          %v571 = vsel %vm427, %v467, -inf
          %v572 = vsel %vm428, %v463, -inf
          %v573 = vsel %vm429, %v467, -inf
          %v574 = vsel %vm430, %v463, -inf
          %v575 = vsel %vm431, %v467, -inf
          %v576 = vsel %vm432, %v463, -inf
          %v577 = vsel %vm433, %v467, -inf
          %v578 = vsel %vm434, %v463, -inf
          %v579 = vsel %vm435, %v467, -inf
          %v580 = vsel %vm436, %v463, -inf
          %v581 = vsel %vm437, %v467, -inf
          %v582 = vsel %vm438, %v463, -inf
          %v583 = vsel %vm439, %v467, -inf
          %v584 = vsel %vm440, %v463, -inf
          %v585 = vsel %vm441, %v467, -inf
          %v586 = vsel %vm442, %v463, -inf
          %v587 = vsel %vm443, %v467, -inf
          %v588 = vsel %vm444, %v463, -inf
          %v589 = vsel %vm445, %v467, -inf
          %v590 = vsel %vm446, %v463, -inf
          %v591 = vsel %vm447, %v467, -inf
          %v592 = vsel %vm448, %v463, -inf
          %v593 = vsel %vm449, %v467, -inf
          %v594 = vsel %vm450, %v463, -inf
          %v595 = vsel %vm451, %v467, -inf
          %v596 = vsel %vm420, %v471, -inf
          %v597 = vsel %vm421, %v475, -inf
          %v598 = vsel %vm422, %v471, -inf
          %v599 = vsel %vm423, %v475, -inf
          %v600 = vsel %vm424, %v471, -inf
          %v601 = vsel %vm425, %v475, -inf
          %v602 = vsel %vm426, %v471, -inf
          %v603 = vsel %vm427, %v475, -inf
          %v604 = vsel %vm428, %v471, -inf
          %v605 = vsel %vm429, %v475, -inf
          %v606 = vsel %vm430, %v471, -inf
          %v607 = vsel %vm431, %v475, -inf
          %v608 = vsel %vm432, %v471, -inf
          %v609 = vsel %vm433, %v475, -inf
          %v610 = vsel %vm434, %v471, -inf
          %v611 = vsel %vm435, %v475, -inf
          %v612 = vsel %vm436, %v471, -inf
          %v613 = vsel %vm437, %v475, -inf
          %v614 = vsel %vm438, %v471, -inf
          %v615 = vsel %vm439, %v475, -inf
          %v616 = vsel %vm440, %v471, -inf
          %v617 = vsel %vm441, %v475, -inf
          %v618 = vsel %vm442, %v471, -inf
          %v619 = vsel %vm443, %v475, -inf
          %v620 = vsel %vm444, %v471, -inf
          %v621 = vsel %vm445, %v475, -inf
          %v622 = vsel %vm446, %v471, -inf
          %v623 = vsel %vm447, %v475, -inf
          %v624 = vsel %vm448, %v471, -inf
          %v625 = vsel %vm449, %v475, -inf
          %v626 = vsel %vm450, %v471, -inf
          %v627 = vsel %vm451, %v475, -inf
          %v628 = vsel %vm420, %v479, -inf
          %v629 = vsel %vm421, %v483, -inf
          %v630 = vsel %vm422, %v479, -inf
          %v631 = vsel %vm423, %v483, -inf
          %v632 = vsel %vm424, %v479, -inf
          %v633 = vsel %vm425, %v483, -inf
          %v634 = vsel %vm426, %v479, -inf
          %v635 = vsel %vm427, %v483, -inf
          %v636 = vsel %vm428, %v479, -inf
          %v637 = vsel %vm429, %v483, -inf
          %v638 = vsel %vm430, %v479, -inf
          %v639 = vsel %vm431, %v483, -inf
          %v640 = vsel %vm432, %v479, -inf
          %v641 = vsel %vm433, %v483, -inf
          %v642 = vsel %vm434, %v479, -inf
          %v643 = vsel %vm435, %v483, -inf
          %v644 = vsel %vm436, %v479, -inf
          %v645 = vsel %vm437, %v483, -inf
          %v646 = vsel %vm438, %v479, -inf
          %v647 = vsel %vm439, %v483, -inf
          %v648 = vsel %vm440, %v479, -inf
          %v649 = vsel %vm441, %v483, -inf
          %v650 = vsel %vm442, %v479, -inf
          %v651 = vsel %vm443, %v483, -inf
          %v652 = vsel %vm444, %v479, -inf
          %v653 = vsel %vm445, %v483, -inf
          %v654 = vsel %vm446, %v479, -inf
          %v655 = vsel %vm447, %v483, -inf
          %v656 = vsel %vm448, %v479, -inf
          %v657 = vsel %vm449, %v483, -inf
          %v658 = vsel %vm450, %v479, -inf
          %v659 = vsel %vm451, %v483, -inf
          %v660 = vsel %vm420, %v487, -inf
          %v661 = vsel %vm421, %v491, -inf
          %v662 = vsel %vm422, %v487, -inf
          %v663 = vsel %vm423, %v491, -inf
          %v664 = vsel %vm424, %v487, -inf
          %v665 = vsel %vm425, %v491, -inf
          %v666 = vsel %vm426, %v487, -inf
          %v667 = vsel %vm427, %v491, -inf
          %v668 = vsel %vm428, %v487, -inf
          %v669 = vsel %vm429, %v491, -inf
          %v670 = vsel %vm430, %v487, -inf
          %v671 = vsel %vm431, %v491, -inf
          %v672 = vsel %vm432, %v487, -inf
          %v673 = vsel %vm433, %v491, -inf
          %v674 = vsel %vm434, %v487, -inf
          %v675 = vsel %vm435, %v491, -inf
          %v676 = vsel %vm436, %v487, -inf
          %v677 = vsel %vm437, %v491, -inf
          %v678 = vsel %vm438, %v487, -inf
          %v679 = vsel %vm439, %v491, -inf
          %v680 = vsel %vm440, %v487, -inf
          %v681 = vsel %vm441, %v491, -inf
          %v682 = vsel %vm442, %v487, -inf
          %v683 = vsel %vm443, %v491, -inf
          %v684 = vsel %vm444, %v487, -inf
          %v685 = vsel %vm445, %v491, -inf
          %v686 = vsel %vm446, %v487, -inf
          %v687 = vsel %vm447, %v491, -inf
          %v688 = vsel %vm448, %v487, -inf
          %v689 = vsel %vm449, %v491, -inf
          %v690 = vsel %vm450, %v487, -inf
          %v691 = vsel %vm451, %v491, -inf
          %v692 = vsel %vm420, %v495, -inf
          %v693 = vsel %vm421, %v499, -inf
          %v694 = vsel %vm422, %v495, -inf
          %v695 = vsel %vm423, %v499, -inf
          %v696 = vsel %vm424, %v495, -inf
          %v697 = vsel %vm425, %v499, -inf
          %v698 = vsel %vm426, %v495, -inf
          %v699 = vsel %vm427, %v499, -inf
          %v700 = vsel %vm428, %v495, -inf
          %v701 = vsel %vm429, %v499, -inf
          %v702 = vsel %vm430, %v495, -inf
          %v703 = vsel %vm431, %v499, -inf
          %v704 = vsel %vm432, %v495, -inf
          %v705 = vsel %vm433, %v499, -inf
          %v706 = vsel %vm434, %v495, -inf
          %v707 = vsel %vm435, %v499, -inf
          %v708 = vsel %vm436, %v495, -inf
          %v709 = vsel %vm437, %v499, -inf
          %v710 = vsel %vm438, %v495, -inf
          %v711 = vsel %vm439, %v499, -inf
          %v712 = vsel %vm440, %v495, -inf
          %v713 = vsel %vm441, %v499, -inf
          %v714 = vsel %vm442, %v495, -inf
          %v715 = vsel %vm443, %v499, -inf
          %v716 = vsel %vm444, %v495, -inf
          %v717 = vsel %vm445, %v499, -inf
          %v718 = vsel %vm446, %v495, -inf
          %v719 = vsel %vm447, %v499, -inf
          %v720 = vsel %vm448, %v495, -inf
          %v721 = vsel %vm449, %v499, -inf
          %v722 = vsel %vm450, %v495, -inf
          %v723 = vsel %vm451, %v499, -inf
          %v724 = vsel %vm420, %v503, -inf
          %v725 = vsel %vm421, %v507, -inf
          %v726 = vsel %vm422, %v503, -inf
          %v727 = vsel %vm423, %v507, -inf
          %v728 = vsel %vm424, %v503, -inf
          %v729 = vsel %vm425, %v507, -inf
          %v730 = vsel %vm426, %v503, -inf
          %v731 = vsel %vm427, %v507, -inf
          %v732 = vsel %vm428, %v503, -inf
          %v733 = vsel %vm429, %v507, -inf
          %v734 = vsel %vm430, %v503, -inf
          %v735 = vsel %vm431, %v507, -inf
          %v736 = vsel %vm432, %v503, -inf
          %v737 = vsel %vm433, %v507, -inf
          %v738 = vsel %vm434, %v503, -inf
          %v739 = vsel %vm435, %v507, -inf
          %v740 = vsel %vm436, %v503, -inf
          %v741 = vsel %vm437, %v507, -inf
          %v742 = vsel %vm438, %v503, -inf
          %v743 = vsel %vm439, %v507, -inf
          %v744 = vsel %vm440, %v503, -inf
          %v745 = vsel %vm441, %v507, -inf
          %v746 = vsel %vm442, %v503, -inf
          %v747 = vsel %vm443, %v507, -inf
          %v748 = vsel %vm444, %v503, -inf
          %v749 = vsel %vm445, %v507, -inf
          %v750 = vsel %vm446, %v503, -inf
          %v751 = vsel %vm447, %v507, -inf
          %v752 = vsel %vm448, %v503, -inf
          %v753 = vsel %vm449, %v507, -inf
          %v754 = vsel %vm450, %v503, -inf
          %v755 = vsel %vm451, %v507, -inf
          %v756 = vsel %vm420, %v511, -inf
          %v757 = vsel %vm421, %v515, -inf
          %v758 = vsel %vm422, %v511, -inf
          %v759 = vsel %vm423, %v515, -inf
          %v760 = vsel %vm424, %v511, -inf
          %v761 = vsel %vm425, %v515, -inf
          %v762 = vsel %vm426, %v511, -inf
          %v763 = vsel %vm427, %v515, -inf
          %v764 = vsel %vm428, %v511, -inf
          %v765 = vsel %vm429, %v515, -inf
          %v766 = vsel %vm430, %v511, -inf
          %v767 = vsel %vm431, %v515, -inf
          %v768 = vsel %vm432, %v511, -inf
          %v769 = vsel %vm433, %v515, -inf
          %v770 = vsel %vm434, %v511, -inf
          %v771 = vsel %vm435, %v515, -inf
          %v772 = vsel %vm436, %v511, -inf
          %v773 = vsel %vm437, %v515, -inf
          %v774 = vsel %vm438, %v511, -inf
          %v775 = vsel %vm439, %v515, -inf
          %v776 = vsel %vm440, %v511, -inf
          %v777 = vsel %vm441, %v515, -inf
          %v778 = vsel %vm442, %v511, -inf
          %v779 = vsel %vm443, %v515, -inf
          %v780 = vsel %vm444, %v511, -inf
          %v781 = vsel %vm445, %v515, -inf
          %v782 = vsel %vm446, %v511, -inf
          %v783 = vsel %vm447, %v515, -inf
          %v784 = vsel %vm448, %v511, -inf
          %v785 = vsel %vm449, %v515, -inf
          %v786 = vsel %vm450, %v511, -inf
          %v787 = vsel %vm451, %v515, -inf
          %v788 = vmax.f32 %v532, %v533
          %789 = vmax.xlane.f32.xlu0 %v788
          %v790 = vpop.xlane.xlu0 %789
          %v791 = vmax.f32 %v534, %v535
          %792 = vmax.xlane.f32.xlu0 %v791
          %v793 = vpop.xlane.xlu0 %792
          %v794 = vmax.f32 %v536, %v537
          %795 = vmax.xlane.f32.xlu0 %v794
          %v796 = vpop.xlane.xlu0 %795
          %v797 = vmax.f32 %v538, %v539
          %798 = vmax.xlane.f32.xlu0 %v797
          %v799 = vpop.xlane.xlu0 %798
          %v800 = vmax.f32 %v540, %v541
          %801 = vmax.xlane.f32.xlu0 %v800
          %v802 = vpop.xlane.xlu0 %801
          %v803 = vmax.f32 %v542, %v543
          %804 = vmax.xlane.f32.xlu0 %v803
          %v805 = vpop.xlane.xlu0 %804
          %v806 = vmax.f32 %v544, %v545
          %807 = vmax.xlane.f32.xlu0 %v806
          %v808 = vpop.xlane.xlu0 %807
          %v809 = vmax.f32 %v546, %v547
          %810 = vmax.xlane.f32.xlu0 %v809
          %v811 = vpop.xlane.xlu0 %810
          %v812 = vmax.f32 %v548, %v549
          %813 = vmax.xlane.f32.xlu0 %v812
          %v814 = vpop.xlane.xlu0 %813
          %v815 = vmax.f32 %v550, %v551
          %816 = vmax.xlane.f32.xlu0 %v815
          %v817 = vpop.xlane.xlu0 %816
          %v818 = vmax.f32 %v552, %v553
          %819 = vmax.xlane.f32.xlu0 %v818
          %v820 = vpop.xlane.xlu0 %819
          %v821 = vmax.f32 %v554, %v555
          %822 = vmax.xlane.f32.xlu0 %v821
          %v823 = vpop.xlane.xlu0 %822
          %v824 = vmax.f32 %v556, %v557
          %825 = vmax.xlane.f32.xlu0 %v824
          %v826 = vpop.xlane.xlu0 %825
          %v827 = vmax.f32 %v558, %v559
          %828 = vmax.xlane.f32.xlu0 %v827
          %v829 = vpop.xlane.xlu0 %828
          %v830 = vmax.f32 %v560, %v561
          %831 = vmax.xlane.f32.xlu0 %v830
          %v832 = vpop.xlane.xlu0 %831
          %v833 = vmax.f32 %v562, %v563
          %834 = vmax.xlane.f32.xlu0 %v833
          %v835 = vpop.xlane.xlu0 %834
          %v836 = vmax.f32 %v564, %v565
          %837 = vmax.xlane.f32.xlu0 %v836
          %v838 = vpop.xlane.xlu0 %837
          %v839 = vmax.f32 %v566, %v567
          %840 = vmax.xlane.f32.xlu0 %v839
          %v841 = vpop.xlane.xlu0 %840
          %v842 = vmax.f32 %v568, %v569
          %843 = vmax.xlane.f32.xlu0 %v842
          %v844 = vpop.xlane.xlu0 %843
          %v845 = vmax.f32 %v570, %v571
          %846 = vmax.xlane.f32.xlu0 %v845
          %v847 = vpop.xlane.xlu0 %846
          %v848 = vmax.f32 %v572, %v573
          %849 = vmax.xlane.f32.xlu0 %v848
          %v850 = vpop.xlane.xlu0 %849
          %v851 = vmax.f32 %v574, %v575
          %852 = vmax.xlane.f32.xlu0 %v851
          %v853 = vpop.xlane.xlu0 %852
          %v854 = vmax.f32 %v576, %v577
          %855 = vmax.xlane.f32.xlu0 %v854
          %v856 = vpop.xlane.xlu0 %855
          %v857 = vmax.f32 %v578, %v579
          %858 = vmax.xlane.f32.xlu0 %v857
          %v859 = vpop.xlane.xlu0 %858
          %v860 = vmax.f32 %v580, %v581
          %861 = vmax.xlane.f32.xlu0 %v860
          %v862 = vpop.xlane.xlu0 %861
          %v863 = vmax.f32 %v582, %v583
          %864 = vmax.xlane.f32.xlu0 %v863
          %v865 = vpop.xlane.xlu0 %864
          %v866 = vmax.f32 %v584, %v585
          %867 = vmax.xlane.f32.xlu0 %v866
          %v868 = vpop.xlane.xlu0 %867
          %v869 = vmax.f32 %v586, %v587
          %870 = vmax.xlane.f32.xlu0 %v869
          %v871 = vpop.xlane.xlu0 %870
          %v872 = vmax.f32 %v588, %v589
          %873 = vmax.xlane.f32.xlu0 %v872
          %v874 = vpop.xlane.xlu0 %873
          %v875 = vmax.f32 %v590, %v591
          %876 = vmax.xlane.f32.xlu0 %v875
          %v877 = vpop.xlane.xlu0 %876
          %v878 = vmax.f32 %v592, %v593
          %879 = vmax.xlane.f32.xlu0 %v878
          %v880 = vpop.xlane.xlu0 %879
          %v881 = vmax.f32 %v594, %v595
          %882 = vmax.xlane.f32.xlu0 %v881
          %v883 = vpop.xlane.xlu0 %882
          %v884 = vmax.f32 %v596, %v597
          %885 = vmax.xlane.f32.xlu0 %v884
          %v886 = vpop.xlane.xlu0 %885
          %v887 = vmax.f32 %v598, %v599
          %888 = vmax.xlane.f32.xlu0 %v887
          %v889 = vpop.xlane.xlu0 %888
          %v890 = vmax.f32 %v600, %v601
          %891 = vmax.xlane.f32.xlu0 %v890
          %v892 = vpop.xlane.xlu0 %891
          %v893 = vmax.f32 %v602, %v603
          %894 = vmax.xlane.f32.xlu0 %v893
          %v895 = vpop.xlane.xlu0 %894
          %v896 = vmax.f32 %v604, %v605
          %897 = vmax.xlane.f32.xlu0 %v896
          %v898 = vpop.xlane.xlu0 %897
          %v899 = vmax.f32 %v606, %v607
          %900 = vmax.xlane.f32.xlu0 %v899
          %v901 = vpop.xlane.xlu0 %900
          %v902 = vmax.f32 %v608, %v609
          %903 = vmax.xlane.f32.xlu0 %v902
          %v904 = vpop.xlane.xlu0 %903
          %v905 = vmax.f32 %v610, %v611
          %906 = vmax.xlane.f32.xlu0 %v905
          %v907 = vpop.xlane.xlu0 %906
          %v908 = vmax.f32 %v612, %v613
          %909 = vmax.xlane.f32.xlu0 %v908
          %v910 = vpop.xlane.xlu0 %909
          %v911 = vmax.f32 %v614, %v615
          %912 = vmax.xlane.f32.xlu0 %v911
          %v913 = vpop.xlane.xlu0 %912
          %v914 = vmax.f32 %v616, %v617
          %915 = vmax.xlane.f32.xlu0 %v914
          %v916 = vpop.xlane.xlu0 %915
          %v917 = vmax.f32 %v618, %v619
          %918 = vmax.xlane.f32.xlu0 %v917
          %v919 = vpop.xlane.xlu0 %918
          %v920 = vmax.f32 %v620, %v621
          %921 = vmax.xlane.f32.xlu0 %v920
          %v922 = vpop.xlane.xlu0 %921
          %v923 = vmax.f32 %v622, %v623
          %924 = vmax.xlane.f32.xlu0 %v923
          %v925 = vpop.xlane.xlu0 %924
          %v926 = vmax.f32 %v624, %v625
          %927 = vmax.xlane.f32.xlu0 %v926
          %v928 = vpop.xlane.xlu0 %927
          %v929 = vmax.f32 %v626, %v627
          %930 = vmax.xlane.f32.xlu0 %v929
          %v931 = vpop.xlane.xlu0 %930
          %v932 = vmax.f32 %v628, %v629
          %933 = vmax.xlane.f32.xlu0 %v932
          %v934 = vpop.xlane.xlu0 %933
          %v935 = vmax.f32 %v630, %v631
          %936 = vmax.xlane.f32.xlu0 %v935
          %v937 = vpop.xlane.xlu0 %936
          %v938 = vmax.f32 %v632, %v633
          %939 = vmax.xlane.f32.xlu0 %v938
          %v940 = vpop.xlane.xlu0 %939
          %v941 = vmax.f32 %v634, %v635
          %942 = vmax.xlane.f32.xlu0 %v941
          %v943 = vpop.xlane.xlu0 %942
          %v944 = vmax.f32 %v636, %v637
          %945 = vmax.xlane.f32.xlu0 %v944
          %v946 = vpop.xlane.xlu0 %945
          %v947 = vmax.f32 %v638, %v639
          %948 = vmax.xlane.f32.xlu0 %v947
          %v949 = vpop.xlane.xlu0 %948
          %v950 = vmax.f32 %v640, %v641
          %951 = vmax.xlane.f32.xlu0 %v950
          %v952 = vpop.xlane.xlu0 %951
          %v953 = vmax.f32 %v642, %v643
          %954 = vmax.xlane.f32.xlu0 %v953
          %v955 = vpop.xlane.xlu0 %954
          %v956 = vmax.f32 %v644, %v645
          %957 = vmax.xlane.f32.xlu0 %v956
          %v958 = vpop.xlane.xlu0 %957
          %v959 = vmax.f32 %v646, %v647
          %960 = vmax.xlane.f32.xlu0 %v959
          %v961 = vpop.xlane.xlu0 %960
          %v962 = vmax.f32 %v648, %v649
          %963 = vmax.xlane.f32.xlu0 %v962
          %v964 = vpop.xlane.xlu0 %963
          %v965 = vmax.f32 %v650, %v651
          %966 = vmax.xlane.f32.xlu0 %v965
          %v967 = vpop.xlane.xlu0 %966
          %v968 = vmax.f32 %v652, %v653
          %969 = vmax.xlane.f32.xlu0 %v968
          %v970 = vpop.xlane.xlu0 %969
          %v971 = vmax.f32 %v654, %v655
          %972 = vmax.xlane.f32.xlu0 %v971
          %v973 = vpop.xlane.xlu0 %972
          %v974 = vmax.f32 %v656, %v657
          %975 = vmax.xlane.f32.xlu0 %v974
          %v976 = vpop.xlane.xlu0 %975
          %v977 = vmax.f32 %v658, %v659
          %978 = vmax.xlane.f32.xlu0 %v977
          %v979 = vpop.xlane.xlu0 %978
          %v980 = vmax.f32 %v660, %v661
          %981 = vmax.xlane.f32.xlu0 %v980
          %v982 = vpop.xlane.xlu0 %981
          %v983 = vmax.f32 %v662, %v663
          %984 = vmax.xlane.f32.xlu0 %v983
          %v985 = vpop.xlane.xlu0 %984
          %v986 = vmax.f32 %v664, %v665
          %987 = vmax.xlane.f32.xlu0 %v986
          %v988 = vpop.xlane.xlu0 %987
          %v989 = vmax.f32 %v666, %v667
          %990 = vmax.xlane.f32.xlu0 %v989
          %v991 = vpop.xlane.xlu0 %990
          %v992 = vmax.f32 %v668, %v669
          %993 = vmax.xlane.f32.xlu0 %v992
          %v994 = vpop.xlane.xlu0 %993
          %v995 = vmax.f32 %v670, %v671
          %996 = vmax.xlane.f32.xlu0 %v995
          %v997 = vpop.xlane.xlu0 %996
          %v998 = vmax.f32 %v672, %v673
          %999 = vmax.xlane.f32.xlu0 %v998
          %v1000 = vpop.xlane.xlu0 %999
          %v1001 = vmax.f32 %v674, %v675
          %1002 = vmax.xlane.f32.xlu0 %v1001
          %v1003 = vpop.xlane.xlu0 %1002
          %v1004 = vmax.f32 %v676, %v677
          %1005 = vmax.xlane.f32.xlu0 %v1004
          %v1006 = vpop.xlane.xlu0 %1005
          %v1007 = vmax.f32 %v678, %v679
          %1008 = vmax.xlane.f32.xlu0 %v1007
          %v1009 = vpop.xlane.xlu0 %1008
          %v1010 = vmax.f32 %v680, %v681
          %1011 = vmax.xlane.f32.xlu0 %v1010
          %v1012 = vpop.xlane.xlu0 %1011
          %v1013 = vmax.f32 %v682, %v683
          %1014 = vmax.xlane.f32.xlu0 %v1013
          %v1015 = vpop.xlane.xlu0 %1014
          %v1016 = vmax.f32 %v684, %v685
          %1017 = vmax.xlane.f32.xlu0 %v1016
          %v1018 = vpop.xlane.xlu0 %1017
          %v1019 = vmax.f32 %v686, %v687
          %1020 = vmax.xlane.f32.xlu0 %v1019
          %v1021 = vpop.xlane.xlu0 %1020
          %v1022 = vmax.f32 %v688, %v689
          %1023 = vmax.xlane.f32.xlu0 %v1022
          %v1024 = vpop.xlane.xlu0 %1023
          %v1025 = vmax.f32 %v690, %v691
          %1026 = vmax.xlane.f32.xlu0 %v1025
          %v1027 = vpop.xlane.xlu0 %1026
          %v1028 = vmax.f32 %v692, %v693
          %1029 = vmax.xlane.f32.xlu0 %v1028
          %v1030 = vpop.xlane.xlu0 %1029
          %v1031 = vmax.f32 %v694, %v695
          %1032 = vmax.xlane.f32.xlu0 %v1031
          %v1033 = vpop.xlane.xlu0 %1032
          %v1034 = vmax.f32 %v696, %v697
          %1035 = vmax.xlane.f32.xlu0 %v1034
          %v1036 = vpop.xlane.xlu0 %1035
          %v1037 = vmax.f32 %v698, %v699
          %1038 = vmax.xlane.f32.xlu0 %v1037
          %v1039 = vpop.xlane.xlu0 %1038
          %v1040 = vmax.f32 %v700, %v701
          %1041 = vmax.xlane.f32.xlu0 %v1040
          %v1042 = vpop.xlane.xlu0 %1041
          %v1043 = vmax.f32 %v702, %v703
          %1044 = vmax.xlane.f32.xlu0 %v1043
          %v1045 = vpop.xlane.xlu0 %1044
          %v1046 = vmax.f32 %v704, %v705
          %1047 = vmax.xlane.f32.xlu0 %v1046
          %v1048 = vpop.xlane.xlu0 %1047
          %v1049 = vmax.f32 %v706, %v707
          %1050 = vmax.xlane.f32.xlu0 %v1049
          %v1051 = vpop.xlane.xlu0 %1050
          %v1052 = vmax.f32 %v708, %v709
          %1053 = vmax.xlane.f32.xlu0 %v1052
          %v1054 = vpop.xlane.xlu0 %1053
          %v1055 = vmax.f32 %v710, %v711
          %1056 = vmax.xlane.f32.xlu0 %v1055
          %v1057 = vpop.xlane.xlu0 %1056
          %v1058 = vmax.f32 %v712, %v713
          %1059 = vmax.xlane.f32.xlu0 %v1058
          %v1060 = vpop.xlane.xlu0 %1059
          %v1061 = vmax.f32 %v714, %v715
          %1062 = vmax.xlane.f32.xlu0 %v1061
          %v1063 = vpop.xlane.xlu0 %1062
          %v1064 = vmax.f32 %v716, %v717
          %1065 = vmax.xlane.f32.xlu0 %v1064
          %v1066 = vpop.xlane.xlu0 %1065
          %v1067 = vmax.f32 %v718, %v719
          %1068 = vmax.xlane.f32.xlu0 %v1067
          %v1069 = vpop.xlane.xlu0 %1068
          %v1070 = vmax.f32 %v720, %v721
          %1071 = vmax.xlane.f32.xlu0 %v1070
          %v1072 = vpop.xlane.xlu0 %1071
          %v1073 = vmax.f32 %v722, %v723
          %1074 = vmax.xlane.f32.xlu0 %v1073
          %v1075 = vpop.xlane.xlu0 %1074
          %v1076 = vmax.f32 %v724, %v725
          %1077 = vmax.xlane.f32.xlu0 %v1076
          %v1078 = vpop.xlane.xlu0 %1077
          %v1079 = vmax.f32 %v726, %v727
          %1080 = vmax.xlane.f32.xlu0 %v1079
          %v1081 = vpop.xlane.xlu0 %1080
          %v1082 = vmax.f32 %v728, %v729
          %1083 = vmax.xlane.f32.xlu0 %v1082
          %v1084 = vpop.xlane.xlu0 %1083
          %v1085 = vmax.f32 %v730, %v731
          %1086 = vmax.xlane.f32.xlu0 %v1085
          %v1087 = vpop.xlane.xlu0 %1086
          %v1088 = vmax.f32 %v732, %v733
          %1089 = vmax.xlane.f32.xlu0 %v1088
          %v1090 = vpop.xlane.xlu0 %1089
          %v1091 = vmax.f32 %v734, %v735
          %1092 = vmax.xlane.f32.xlu0 %v1091
          %v1093 = vpop.xlane.xlu0 %1092
          %v1094 = vmax.f32 %v736, %v737
          %1095 = vmax.xlane.f32.xlu0 %v1094
          %v1096 = vpop.xlane.xlu0 %1095
          %v1097 = vmax.f32 %v738, %v739
          %1098 = vmax.xlane.f32.xlu0 %v1097
          %v1099 = vpop.xlane.xlu0 %1098
          %v1100 = vmax.f32 %v740, %v741
          %1101 = vmax.xlane.f32.xlu0 %v1100
          %v1102 = vpop.xlane.xlu0 %1101
          %v1103 = vmax.f32 %v742, %v743
          %1104 = vmax.xlane.f32.xlu0 %v1103
          %v1105 = vpop.xlane.xlu0 %1104
          %v1106 = vmax.f32 %v744, %v745
          %1107 = vmax.xlane.f32.xlu0 %v1106
          %v1108 = vpop.xlane.xlu0 %1107
          %v1109 = vmax.f32 %v746, %v747
          %1110 = vmax.xlane.f32.xlu0 %v1109
          %v1111 = vpop.xlane.xlu0 %1110
          %v1112 = vmax.f32 %v748, %v749
          %1113 = vmax.xlane.f32.xlu0 %v1112
          %v1114 = vpop.xlane.xlu0 %1113
          %v1115 = vmax.f32 %v750, %v751
          %1116 = vmax.xlane.f32.xlu0 %v1115
          %v1117 = vpop.xlane.xlu0 %1116
          %v1118 = vmax.f32 %v752, %v753
          %1119 = vmax.xlane.f32.xlu0 %v1118
          %v1120 = vpop.xlane.xlu0 %1119
          %v1121 = vmax.f32 %v754, %v755
          %1122 = vmax.xlane.f32.xlu0 %v1121
          %v1123 = vpop.xlane.xlu0 %1122
          %v1124 = vmax.f32 %v756, %v757
          %1125 = vmax.xlane.f32.xlu0 %v1124
          %v1126 = vpop.xlane.xlu0 %1125
          %v1127 = vmax.f32 %v758, %v759
          %1128 = vmax.xlane.f32.xlu0 %v1127
          %v1129 = vpop.xlane.xlu0 %1128
          %v1130 = vmax.f32 %v760, %v761
          %1131 = vmax.xlane.f32.xlu0 %v1130
          %v1132 = vpop.xlane.xlu0 %1131
          %v1133 = vmax.f32 %v762, %v763
          %1134 = vmax.xlane.f32.xlu0 %v1133
          %v1135 = vpop.xlane.xlu0 %1134
          %v1136 = vmax.f32 %v764, %v765
          %1137 = vmax.xlane.f32.xlu0 %v1136
          %v1138 = vpop.xlane.xlu0 %1137
          %v1139 = vmax.f32 %v766, %v767
          %1140 = vmax.xlane.f32.xlu0 %v1139
          %v1141 = vpop.xlane.xlu0 %1140
          %v1142 = vmax.f32 %v768, %v769
          %1143 = vmax.xlane.f32.xlu0 %v1142
          %v1144 = vpop.xlane.xlu0 %1143
          %v1145 = vmax.f32 %v770, %v771
          %1146 = vmax.xlane.f32.xlu0 %v1145
          %v1147 = vpop.xlane.xlu0 %1146
          %v1148 = vmax.f32 %v772, %v773
          %1149 = vmax.xlane.f32.xlu0 %v1148
          %v1150 = vpop.xlane.xlu0 %1149
          %v1151 = vmax.f32 %v774, %v775
          %1152 = vmax.xlane.f32.xlu0 %v1151
          %v1153 = vpop.xlane.xlu0 %1152
          %v1154 = vmax.f32 %v776, %v777
          %1155 = vmax.xlane.f32.xlu0 %v1154
          %v1156 = vpop.xlane.xlu0 %1155
          %v1157 = vmax.f32 %v778, %v779
          %1158 = vmax.xlane.f32.xlu0 %v1157
          %v1159 = vpop.xlane.xlu0 %1158
          %v1160 = vmax.f32 %v780, %v781
          %1161 = vmax.xlane.f32.xlu0 %v1160
          %v1162 = vpop.xlane.xlu0 %1161
          %v1163 = vmax.f32 %v782, %v783
          %1164 = vmax.xlane.f32.xlu0 %v1163
          %v1165 = vpop.xlane.xlu0 %1164
          %v1166 = vmax.f32 %v784, %v785
          %1167 = vmax.xlane.f32.xlu0 %v1166
          %v1168 = vpop.xlane.xlu0 %1167
          %v1169 = vmax.f32 %v786, %v787
          %1170 = vmax.xlane.f32.xlu0 %v1169
          %v1171 = vpop.xlane.xlu0 %1170
          %s1172 = sshra.s32 %s261, 7
          %s1173 = sand.u32 %s261, 127
          %s1174 = smul.addr %s1172, 8
          %s1175 = scalar_lea.vmem [#allocation2], %s1174
          %v1176 = vld [vmem:[%s1175] sm:$0xff]
          %v1305 = vlaneseq
          %v1306 = vand.u32 %v1305, 127
          %v1307 = vlaneseq
          %v1308 = vshrl.u32 %v1307, 7
          %v1309 = vsub.s32 %v1306, %v1308
          %v1310 = vrot.slane %v790, %v1309
          %v1311 = vadd.s32 %v1306, 4294967288
          %v1312 = vlaneseq
          %v1313 = vshrl.u32 %v1312, 7
          %v1314 = vsub.s32 %v1311, %v1313
          %v1315 = vrot.slane %v793, %v1314
          %vm1316 = vcmask 130112
          %v1317 = vsel %vm1316, %v1315, %v1310
          %v1318 = vadd.s32 %v1306, 4294967280
          %v1319 = vlaneseq
          %v1320 = vshrl.u32 %v1319, 7
          %v1321 = vsub.s32 %v1318, %v1320
          %v1322 = vrot.slane %v796, %v1321
          %vm1323 = vcmask 195712
          %v1324 = vsel %vm1323, %v1322, %v1317
          %v1325 = vadd.s32 %v1306, 4294967272
          %v1326 = vlaneseq
          %v1327 = vshrl.u32 %v1326, 7
          %v1328 = vsub.s32 %v1325, %v1327
          %v1329 = vrot.slane %v799, %v1328
          %vm1330 = vcmask 261312
          %v1331 = vsel %vm1330, %v1329, %v1324
          %v1332 = vadd.s32 %v1306, 4294967264
          %v1333 = vlaneseq
          %v1334 = vshrl.u32 %v1333, 7
          %v1335 = vsub.s32 %v1332, %v1334
          %v1336 = vrot.slane %v802, %v1335
          %vm1337 = vcmask 326912
          %v1338 = vsel %vm1337, %v1336, %v1331
          %v1339 = vadd.s32 %v1306, 4294967256
          %v1340 = vlaneseq
          %v1341 = vshrl.u32 %v1340, 7
          %v1342 = vsub.s32 %v1339, %v1341
          %v1343 = vrot.slane %v805, %v1342
          %vm1344 = vcmask 392512
          %v1345 = vsel %vm1344, %v1343, %v1338
          %v1346 = vadd.s32 %v1306, 4294967248
          %v1347 = vlaneseq
          %v1348 = vshrl.u32 %v1347, 7
          %v1349 = vsub.s32 %v1346, %v1348
          %v1350 = vrot.slane %v808, %v1349
          %vm1351 = vcmask 458112
          %v1352 = vsel %vm1351, %v1350, %v1345
          %v1353 = vadd.s32 %v1306, 4294967240
          %v1354 = vlaneseq
          %v1355 = vshrl.u32 %v1354, 7
          %v1356 = vsub.s32 %v1353, %v1355
          %v1357 = vrot.slane %v811, %v1356
          %vm1358 = vcmask 523712
          %v1359 = vsel %vm1358, %v1357, %v1352
          %v1360 = vadd.s32 %v1306, 4294967232
          %v1361 = vlaneseq
          %v1362 = vshrl.u32 %v1361, 7
          %v1363 = vsub.s32 %v1360, %v1362
          %v1364 = vrot.slane %v814, %v1363
          %vm1365 = vcmask 589312
          %v1366 = vsel %vm1365, %v1364, %v1359
          %v1367 = vadd.s32 %v1306, 4294967224
          %v1368 = vlaneseq
          %v1369 = vshrl.u32 %v1368, 7
          %v1370 = vsub.s32 %v1367, %v1369
          %v1371 = vrot.slane %v817, %v1370
          %vm1372 = vcmask 654912
          %v1373 = vsel %vm1372, %v1371, %v1366
          %v1374 = vadd.s32 %v1306, 4294967216
          %v1375 = vlaneseq
          %v1376 = vshrl.u32 %v1375, 7
          %v1377 = vsub.s32 %v1374, %v1376
          %v1378 = vrot.slane %v820, %v1377
          %vm1379 = vcmask 720512
          %v1380 = vsel %vm1379, %v1378, %v1373
          %v1381 = vadd.s32 %v1306, 4294967208
          %v1382 = vlaneseq
          %v1383 = vshrl.u32 %v1382, 7
          %v1384 = vsub.s32 %v1381, %v1383
          %v1385 = vrot.slane %v823, %v1384
          %vm1386 = vcmask 786112
          %v1387 = vsel %vm1386, %v1385, %v1380
          %v1388 = vadd.s32 %v1306, 4294967200
          %v1389 = vlaneseq
          %v1390 = vshrl.u32 %v1389, 7
          %v1391 = vsub.s32 %v1388, %v1390
          %v1392 = vrot.slane %v826, %v1391
          %vm1393 = vcmask 851712
          %v1394 = vsel %vm1393, %v1392, %v1387
          %v1395 = vadd.s32 %v1306, 4294967192
          %v1396 = vlaneseq
          %v1397 = vshrl.u32 %v1396, 7
          %v1398 = vsub.s32 %v1395, %v1397
          %v1399 = vrot.slane %v829, %v1398
          %vm1400 = vcmask 917312
          %v1401 = vsel %vm1400, %v1399, %v1394
          %v1402 = vadd.s32 %v1306, 4294967184
          %v1403 = vlaneseq
          %v1404 = vshrl.u32 %v1403, 7
          %v1405 = vsub.s32 %v1402, %v1404
          %v1406 = vrot.slane %v832, %v1405
          %vm1407 = vcmask 982912
          %v1408 = vsel %vm1407, %v1406, %v1401
          %v1409 = vadd.s32 %v1306, 4294967176
          %v1410 = vlaneseq
          %v1411 = vshrl.u32 %v1410, 7
          %v1412 = vsub.s32 %v1409, %v1411
          %v1413 = vrot.slane %v835, %v1412
          %vm1414 = vcmask 1048512
          %v1415 = vsel %vm1414, %v1413, %v1408
          %v1416 = vlaneseq
          %v1417 = vshrl.u32 %v1416, 7
          %v1418 = vsub.s32 %v1306, %v1417
          %v1419 = vrot.slane %v838, %v1418
          %v1420 = vlaneseq
          %v1421 = vshrl.u32 %v1420, 7
          %v1422 = vsub.s32 %v1311, %v1421
          %v1423 = vrot.slane %v841, %v1422
          %v1424 = vsel %vm1316, %v1423, %v1419
          %v1425 = vlaneseq
          %v1426 = vshrl.u32 %v1425, 7
          %v1427 = vsub.s32 %v1318, %v1426
          %v1428 = vrot.slane %v844, %v1427
          %v1429 = vsel %vm1323, %v1428, %v1424
          %v1430 = vlaneseq
          %v1431 = vshrl.u32 %v1430, 7
          %v1432 = vsub.s32 %v1325, %v1431
          %v1433 = vrot.slane %v847, %v1432
          %v1434 = vsel %vm1330, %v1433, %v1429
          %v1435 = vlaneseq
          %v1436 = vshrl.u32 %v1435, 7
          %v1437 = vsub.s32 %v1332, %v1436
          %v1438 = vrot.slane %v850, %v1437
          %v1439 = vsel %vm1337, %v1438, %v1434
          %v1440 = vlaneseq
          %v1441 = vshrl.u32 %v1440, 7
          %v1442 = vsub.s32 %v1339, %v1441
          %v1443 = vrot.slane %v853, %v1442
          %v1444 = vsel %vm1344, %v1443, %v1439
          %v1445 = vlaneseq
          %v1446 = vshrl.u32 %v1445, 7
          %v1447 = vsub.s32 %v1346, %v1446
          %v1448 = vrot.slane %v856, %v1447
          %v1449 = vsel %vm1351, %v1448, %v1444
          %v1450 = vlaneseq
          %v1451 = vshrl.u32 %v1450, 7
          %v1452 = vsub.s32 %v1353, %v1451
          %v1453 = vrot.slane %v859, %v1452
          %v1454 = vsel %vm1358, %v1453, %v1449
          %v1455 = vlaneseq
          %v1456 = vshrl.u32 %v1455, 7
          %v1457 = vsub.s32 %v1360, %v1456
          %v1458 = vrot.slane %v862, %v1457
          %v1459 = vsel %vm1365, %v1458, %v1454
          %v1460 = vlaneseq
          %v1461 = vshrl.u32 %v1460, 7
          %v1462 = vsub.s32 %v1367, %v1461
          %v1463 = vrot.slane %v865, %v1462
          %v1464 = vsel %vm1372, %v1463, %v1459
          %v1465 = vlaneseq
          %v1466 = vshrl.u32 %v1465, 7
          %v1467 = vsub.s32 %v1374, %v1466
          %v1468 = vrot.slane %v868, %v1467
          %v1469 = vsel %vm1379, %v1468, %v1464
          %v1470 = vlaneseq
          %v1471 = vshrl.u32 %v1470, 7
          %v1472 = vsub.s32 %v1381, %v1471
          %v1473 = vrot.slane %v871, %v1472
          %v1474 = vsel %vm1386, %v1473, %v1469
          %v1475 = vlaneseq
          %v1476 = vshrl.u32 %v1475, 7
          %v1477 = vsub.s32 %v1388, %v1476
          %v1478 = vrot.slane %v874, %v1477
          %v1479 = vsel %vm1393, %v1478, %v1474
          %v1480 = vlaneseq
          %v1481 = vshrl.u32 %v1480, 7
          %v1482 = vsub.s32 %v1395, %v1481
          %v1483 = vrot.slane %v877, %v1482
          %v1484 = vsel %vm1400, %v1483, %v1479
          %v1485 = vlaneseq
          %v1486 = vshrl.u32 %v1485, 7
          %v1487 = vsub.s32 %v1402, %v1486
          %v1488 = vrot.slane %v880, %v1487
          %v1489 = vsel %vm1407, %v1488, %v1484
          %v1490 = vlaneseq
          %v1491 = vshrl.u32 %v1490, 7
          %v1492 = vsub.s32 %v1409, %v1491
          %v1493 = vrot.slane %v883, %v1492
          %v1494 = vsel %vm1414, %v1493, %v1489
          %v1495 = vlaneseq
          %v1496 = vshrl.u32 %v1495, 7
          %v1497 = vsub.s32 %v1306, %v1496
          %v1498 = vrot.slane %v886, %v1497
          %v1499 = vlaneseq
          %v1500 = vshrl.u32 %v1499, 7
          %v1501 = vsub.s32 %v1311, %v1500
          %v1502 = vrot.slane %v889, %v1501
          %v1503 = vsel %vm1316, %v1502, %v1498
          %v1504 = vlaneseq
          %v1505 = vshrl.u32 %v1504, 7
          %v1506 = vsub.s32 %v1318, %v1505
          %v1507 = vrot.slane %v892, %v1506
          %v1508 = vsel %vm1323, %v1507, %v1503
          %v1509 = vlaneseq
          %v1510 = vshrl.u32 %v1509, 7
          %v1511 = vsub.s32 %v1325, %v1510
          %v1512 = vrot.slane %v895, %v1511
          %v1513 = vsel %vm1330, %v1512, %v1508
          %v1514 = vlaneseq
          %v1515 = vshrl.u32 %v1514, 7
          %v1516 = vsub.s32 %v1332, %v1515
          %v1517 = vrot.slane %v898, %v1516
          %v1518 = vsel %vm1337, %v1517, %v1513
          %v1519 = vlaneseq
          %v1520 = vshrl.u32 %v1519, 7
          %v1521 = vsub.s32 %v1339, %v1520
          %v1522 = vrot.slane %v901, %v1521
          %v1523 = vsel %vm1344, %v1522, %v1518
          %v1524 = vlaneseq
          %v1525 = vshrl.u32 %v1524, 7
          %v1526 = vsub.s32 %v1346, %v1525
          %v1527 = vrot.slane %v904, %v1526
          %v1528 = vsel %vm1351, %v1527, %v1523
          %v1529 = vlaneseq
          %v1530 = vshrl.u32 %v1529, 7
          %v1531 = vsub.s32 %v1353, %v1530
          %v1532 = vrot.slane %v907, %v1531
          %v1533 = vsel %vm1358, %v1532, %v1528
          %v1534 = vlaneseq
          %v1535 = vshrl.u32 %v1534, 7
          %v1536 = vsub.s32 %v1360, %v1535
          %v1537 = vrot.slane %v910, %v1536
          %v1538 = vsel %vm1365, %v1537, %v1533
          %v1539 = vlaneseq
          %v1540 = vshrl.u32 %v1539, 7
          %v1541 = vsub.s32 %v1367, %v1540
          %v1542 = vrot.slane %v913, %v1541
          %v1543 = vsel %vm1372, %v1542, %v1538
          %v1544 = vlaneseq
          %v1545 = vshrl.u32 %v1544, 7
          %v1546 = vsub.s32 %v1374, %v1545
          %v1547 = vrot.slane %v916, %v1546
          %v1548 = vsel %vm1379, %v1547, %v1543
          %v1549 = vlaneseq
          %v1550 = vshrl.u32 %v1549, 7
          %v1551 = vsub.s32 %v1381, %v1550
          %v1552 = vrot.slane %v919, %v1551
          %v1553 = vsel %vm1386, %v1552, %v1548
          %v1554 = vlaneseq
          %v1555 = vshrl.u32 %v1554, 7
          %v1556 = vsub.s32 %v1388, %v1555
          %v1557 = vrot.slane %v922, %v1556
          %v1558 = vsel %vm1393, %v1557, %v1553
          %v1559 = vlaneseq
          %v1560 = vshrl.u32 %v1559, 7
          %v1561 = vsub.s32 %v1395, %v1560
          %v1562 = vrot.slane %v925, %v1561
          %v1563 = vsel %vm1400, %v1562, %v1558
          %v1564 = vlaneseq
          %v1565 = vshrl.u32 %v1564, 7
          %v1566 = vsub.s32 %v1402, %v1565
          %v1567 = vrot.slane %v928, %v1566
          %v1568 = vsel %vm1407, %v1567, %v1563
          %v1569 = vlaneseq
          %v1570 = vshrl.u32 %v1569, 7
          %v1571 = vsub.s32 %v1409, %v1570
          %v1572 = vrot.slane %v931, %v1571
          %v1573 = vsel %vm1414, %v1572, %v1568
          %v1574 = vlaneseq
          %v1575 = vshrl.u32 %v1574, 7
          %v1576 = vsub.s32 %v1306, %v1575
          %v1577 = vrot.slane %v934, %v1576
          %v1578 = vlaneseq
          %v1579 = vshrl.u32 %v1578, 7
          %v1580 = vsub.s32 %v1311, %v1579
          %v1581 = vrot.slane %v937, %v1580
          %v1582 = vsel %vm1316, %v1581, %v1577
          %v1583 = vlaneseq
          %v1584 = vshrl.u32 %v1583, 7
          %v1585 = vsub.s32 %v1318, %v1584
          %v1586 = vrot.slane %v940, %v1585
          %v1587 = vsel %vm1323, %v1586, %v1582
          %v1588 = vlaneseq
          %v1589 = vshrl.u32 %v1588, 7
          %v1590 = vsub.s32 %v1325, %v1589
          %v1591 = vrot.slane %v943, %v1590
          %v1592 = vsel %vm1330, %v1591, %v1587
          %v1593 = vlaneseq
          %v1594 = vshrl.u32 %v1593, 7
          %v1595 = vsub.s32 %v1332, %v1594
          %v1596 = vrot.slane %v946, %v1595
          %v1597 = vsel %vm1337, %v1596, %v1592
          %v1598 = vlaneseq
          %v1599 = vshrl.u32 %v1598, 7
          %v1600 = vsub.s32 %v1339, %v1599
          %v1601 = vrot.slane %v949, %v1600
          %v1602 = vsel %vm1344, %v1601, %v1597
          %v1603 = vlaneseq
          %v1604 = vshrl.u32 %v1603, 7
          %v1605 = vsub.s32 %v1346, %v1604
          %v1606 = vrot.slane %v952, %v1605
          %v1607 = vsel %vm1351, %v1606, %v1602
          %v1608 = vlaneseq
          %v1609 = vshrl.u32 %v1608, 7
          %v1610 = vsub.s32 %v1353, %v1609
          %v1611 = vrot.slane %v955, %v1610
          %v1612 = vsel %vm1358, %v1611, %v1607
          %v1613 = vlaneseq
          %v1614 = vshrl.u32 %v1613, 7
          %v1615 = vsub.s32 %v1360, %v1614
          %v1616 = vrot.slane %v958, %v1615
          %v1617 = vsel %vm1365, %v1616, %v1612
          %v1618 = vlaneseq
          %v1619 = vshrl.u32 %v1618, 7
          %v1620 = vsub.s32 %v1367, %v1619
          %v1621 = vrot.slane %v961, %v1620
          %v1622 = vsel %vm1372, %v1621, %v1617
          %v1623 = vlaneseq
          %v1624 = vshrl.u32 %v1623, 7
          %v1625 = vsub.s32 %v1374, %v1624
          %v1626 = vrot.slane %v964, %v1625
          %v1627 = vsel %vm1379, %v1626, %v1622
          %v1628 = vlaneseq
          %v1629 = vshrl.u32 %v1628, 7
          %v1630 = vsub.s32 %v1381, %v1629
          %v1631 = vrot.slane %v967, %v1630
          %v1632 = vsel %vm1386, %v1631, %v1627
          %v1633 = vlaneseq
          %v1634 = vshrl.u32 %v1633, 7
          %v1635 = vsub.s32 %v1388, %v1634
          %v1636 = vrot.slane %v970, %v1635
          %v1637 = vsel %vm1393, %v1636, %v1632
          %v1638 = vlaneseq
          %v1639 = vshrl.u32 %v1638, 7
          %v1640 = vsub.s32 %v1395, %v1639
          %v1641 = vrot.slane %v973, %v1640
          %v1642 = vsel %vm1400, %v1641, %v1637
          %v1643 = vlaneseq
          %v1644 = vshrl.u32 %v1643, 7
          %v1645 = vsub.s32 %v1402, %v1644
          %v1646 = vrot.slane %v976, %v1645
          %v1647 = vsel %vm1407, %v1646, %v1642
          %v1648 = vlaneseq
          %v1649 = vshrl.u32 %v1648, 7
          %v1650 = vsub.s32 %v1409, %v1649
          %v1651 = vrot.slane %v979, %v1650
          %v1652 = vsel %vm1414, %v1651, %v1647
          %v1653 = vlaneseq
          %v1654 = vshrl.u32 %v1653, 7
          %v1655 = vsub.s32 %v1306, %v1654
          %v1656 = vrot.slane %v982, %v1655
          %v1657 = vlaneseq
          %v1658 = vshrl.u32 %v1657, 7
          %v1659 = vsub.s32 %v1311, %v1658
          %v1660 = vrot.slane %v985, %v1659
          %v1661 = vsel %vm1316, %v1660, %v1656
          %v1662 = vlaneseq
          %v1663 = vshrl.u32 %v1662, 7
          %v1664 = vsub.s32 %v1318, %v1663
          %v1665 = vrot.slane %v988, %v1664
          %v1666 = vsel %vm1323, %v1665, %v1661
          %v1667 = vlaneseq
          %v1668 = vshrl.u32 %v1667, 7
          %v1669 = vsub.s32 %v1325, %v1668
          %v1670 = vrot.slane %v991, %v1669
          %v1671 = vsel %vm1330, %v1670, %v1666
          %v1672 = vlaneseq
          %v1673 = vshrl.u32 %v1672, 7
          %v1674 = vsub.s32 %v1332, %v1673
          %v1675 = vrot.slane %v994, %v1674
          %v1676 = vsel %vm1337, %v1675, %v1671
          %v1677 = vlaneseq
          %v1678 = vshrl.u32 %v1677, 7
          %v1679 = vsub.s32 %v1339, %v1678
          %v1680 = vrot.slane %v997, %v1679
          %v1681 = vsel %vm1344, %v1680, %v1676
          %v1682 = vlaneseq
          %v1683 = vshrl.u32 %v1682, 7
          %v1684 = vsub.s32 %v1346, %v1683
          %v1685 = vrot.slane %v1000, %v1684
          %v1686 = vsel %vm1351, %v1685, %v1681
          %v1687 = vlaneseq
          %v1688 = vshrl.u32 %v1687, 7
          %v1689 = vsub.s32 %v1353, %v1688
          %v1690 = vrot.slane %v1003, %v1689
          %v1691 = vsel %vm1358, %v1690, %v1686
          %v1692 = vlaneseq
          %v1693 = vshrl.u32 %v1692, 7
          %v1694 = vsub.s32 %v1360, %v1693
          %v1695 = vrot.slane %v1006, %v1694
          %v1696 = vsel %vm1365, %v1695, %v1691
          %v1697 = vlaneseq
          %v1698 = vshrl.u32 %v1697, 7
          %v1699 = vsub.s32 %v1367, %v1698
          %v1700 = vrot.slane %v1009, %v1699
          %v1701 = vsel %vm1372, %v1700, %v1696
          %v1702 = vlaneseq
          %v1703 = vshrl.u32 %v1702, 7
          %v1704 = vsub.s32 %v1374, %v1703
          %v1705 = vrot.slane %v1012, %v1704
          %v1706 = vsel %vm1379, %v1705, %v1701
          %v1707 = vlaneseq
          %v1708 = vshrl.u32 %v1707, 7
          %v1709 = vsub.s32 %v1381, %v1708
          %v1710 = vrot.slane %v1015, %v1709
          %v1711 = vsel %vm1386, %v1710, %v1706
          %v1712 = vlaneseq
          %v1713 = vshrl.u32 %v1712, 7
          %v1714 = vsub.s32 %v1388, %v1713
          %v1715 = vrot.slane %v1018, %v1714
          %v1716 = vsel %vm1393, %v1715, %v1711
          %v1717 = vlaneseq
          %v1718 = vshrl.u32 %v1717, 7
          %v1719 = vsub.s32 %v1395, %v1718
          %v1720 = vrot.slane %v1021, %v1719
          %v1721 = vsel %vm1400, %v1720, %v1716
          %v1722 = vlaneseq
          %v1723 = vshrl.u32 %v1722, 7
          %v1724 = vsub.s32 %v1402, %v1723
          %v1725 = vrot.slane %v1024, %v1724
          %v1726 = vsel %vm1407, %v1725, %v1721
          %v1727 = vlaneseq
          %v1728 = vshrl.u32 %v1727, 7
          %v1729 = vsub.s32 %v1409, %v1728
          %v1730 = vrot.slane %v1027, %v1729
          %v1731 = vsel %vm1414, %v1730, %v1726
          %v1732 = vlaneseq
          %v1733 = vshrl.u32 %v1732, 7
          %v1734 = vsub.s32 %v1306, %v1733
          %v1735 = vrot.slane %v1030, %v1734
          %v1736 = vlaneseq
          %v1737 = vshrl.u32 %v1736, 7
          %v1738 = vsub.s32 %v1311, %v1737
          %v1739 = vrot.slane %v1033, %v1738
          %v1740 = vsel %vm1316, %v1739, %v1735
          %v1741 = vlaneseq
          %v1742 = vshrl.u32 %v1741, 7
          %v1743 = vsub.s32 %v1318, %v1742
          %v1744 = vrot.slane %v1036, %v1743
          %v1745 = vsel %vm1323, %v1744, %v1740
          %v1746 = vlaneseq
          %v1747 = vshrl.u32 %v1746, 7
          %v1748 = vsub.s32 %v1325, %v1747
          %v1749 = vrot.slane %v1039, %v1748
          %v1750 = vsel %vm1330, %v1749, %v1745
          %v1751 = vlaneseq
          %v1752 = vshrl.u32 %v1751, 7
          %v1753 = vsub.s32 %v1332, %v1752
          %v1754 = vrot.slane %v1042, %v1753
          %v1755 = vsel %vm1337, %v1754, %v1750
          %v1756 = vlaneseq
          %v1757 = vshrl.u32 %v1756, 7
          %v1758 = vsub.s32 %v1339, %v1757
          %v1759 = vrot.slane %v1045, %v1758
          %v1760 = vsel %vm1344, %v1759, %v1755
          %v1761 = vlaneseq
          %v1762 = vshrl.u32 %v1761, 7
          %v1763 = vsub.s32 %v1346, %v1762
          %v1764 = vrot.slane %v1048, %v1763
          %v1765 = vsel %vm1351, %v1764, %v1760
          %v1766 = vlaneseq
          %v1767 = vshrl.u32 %v1766, 7
          %v1768 = vsub.s32 %v1353, %v1767
          %v1769 = vrot.slane %v1051, %v1768
          %v1770 = vsel %vm1358, %v1769, %v1765
          %v1771 = vlaneseq
          %v1772 = vshrl.u32 %v1771, 7
          %v1773 = vsub.s32 %v1360, %v1772
          %v1774 = vrot.slane %v1054, %v1773
          %v1775 = vsel %vm1365, %v1774, %v1770
          %v1776 = vlaneseq
          %v1777 = vshrl.u32 %v1776, 7
          %v1778 = vsub.s32 %v1367, %v1777
          %v1779 = vrot.slane %v1057, %v1778
          %v1780 = vsel %vm1372, %v1779, %v1775
          %v1781 = vlaneseq
          %v1782 = vshrl.u32 %v1781, 7
          %v1783 = vsub.s32 %v1374, %v1782
          %v1784 = vrot.slane %v1060, %v1783
          %v1785 = vsel %vm1379, %v1784, %v1780
          %v1786 = vlaneseq
          %v1787 = vshrl.u32 %v1786, 7
          %v1788 = vsub.s32 %v1381, %v1787
          %v1789 = vrot.slane %v1063, %v1788
          %v1790 = vsel %vm1386, %v1789, %v1785
          %v1791 = vlaneseq
          %v1792 = vshrl.u32 %v1791, 7
          %v1793 = vsub.s32 %v1388, %v1792
          %v1794 = vrot.slane %v1066, %v1793
          %v1795 = vsel %vm1393, %v1794, %v1790
          %v1796 = vlaneseq
          %v1797 = vshrl.u32 %v1796, 7
          %v1798 = vsub.s32 %v1395, %v1797
          %v1799 = vrot.slane %v1069, %v1798
          %v1800 = vsel %vm1400, %v1799, %v1795
          %v1801 = vlaneseq
          %v1802 = vshrl.u32 %v1801, 7
          %v1803 = vsub.s32 %v1402, %v1802
          %v1804 = vrot.slane %v1072, %v1803
          %v1805 = vsel %vm1407, %v1804, %v1800
          %v1806 = vlaneseq
          %v1807 = vshrl.u32 %v1806, 7
          %v1808 = vsub.s32 %v1409, %v1807
          %v1809 = vrot.slane %v1075, %v1808
          %v1810 = vsel %vm1414, %v1809, %v1805
          %v1811 = vlaneseq
          %v1812 = vshrl.u32 %v1811, 7
          %v1813 = vsub.s32 %v1306, %v1812
          %v1814 = vrot.slane %v1078, %v1813
          %v1815 = vlaneseq
          %v1816 = vshrl.u32 %v1815, 7
          %v1817 = vsub.s32 %v1311, %v1816
          %v1818 = vrot.slane %v1081, %v1817
          %v1819 = vsel %vm1316, %v1818, %v1814
          %v1820 = vlaneseq
          %v1821 = vshrl.u32 %v1820, 7
          %v1822 = vsub.s32 %v1318, %v1821
          %v1823 = vrot.slane %v1084, %v1822
          %v1824 = vsel %vm1323, %v1823, %v1819
          %v1825 = vlaneseq
          %v1826 = vshrl.u32 %v1825, 7
          %v1827 = vsub.s32 %v1325, %v1826
          %v1828 = vrot.slane %v1087, %v1827
          %v1829 = vsel %vm1330, %v1828, %v1824
          %v1830 = vlaneseq
          %v1831 = vshrl.u32 %v1830, 7
          %v1832 = vsub.s32 %v1332, %v1831
          %v1833 = vrot.slane %v1090, %v1832
          %v1834 = vsel %vm1337, %v1833, %v1829
          %v1835 = vlaneseq
          %v1836 = vshrl.u32 %v1835, 7
          %v1837 = vsub.s32 %v1339, %v1836
          %v1838 = vrot.slane %v1093, %v1837
          %v1839 = vsel %vm1344, %v1838, %v1834
          %v1840 = vlaneseq
          %v1841 = vshrl.u32 %v1840, 7
          %v1842 = vsub.s32 %v1346, %v1841
          %v1843 = vrot.slane %v1096, %v1842
          %v1844 = vsel %vm1351, %v1843, %v1839
          %v1845 = vlaneseq
          %v1846 = vshrl.u32 %v1845, 7
          %v1847 = vsub.s32 %v1353, %v1846
          %v1848 = vrot.slane %v1099, %v1847
          %v1849 = vsel %vm1358, %v1848, %v1844
          %v1850 = vlaneseq
          %v1851 = vshrl.u32 %v1850, 7
          %v1852 = vsub.s32 %v1360, %v1851
          %v1853 = vrot.slane %v1102, %v1852
          %v1854 = vsel %vm1365, %v1853, %v1849
          %v1855 = vlaneseq
          %v1856 = vshrl.u32 %v1855, 7
          %v1857 = vsub.s32 %v1367, %v1856
          %v1858 = vrot.slane %v1105, %v1857
          %v1859 = vsel %vm1372, %v1858, %v1854
          %v1860 = vlaneseq
          %v1861 = vshrl.u32 %v1860, 7
          %v1862 = vsub.s32 %v1374, %v1861
          %v1863 = vrot.slane %v1108, %v1862
          %v1864 = vsel %vm1379, %v1863, %v1859
          %v1865 = vlaneseq
          %v1866 = vshrl.u32 %v1865, 7
          %v1867 = vsub.s32 %v1381, %v1866
          %v1868 = vrot.slane %v1111, %v1867
          %v1869 = vsel %vm1386, %v1868, %v1864
          %v1870 = vlaneseq
          %v1871 = vshrl.u32 %v1870, 7
          %v1872 = vsub.s32 %v1388, %v1871
          %v1873 = vrot.slane %v1114, %v1872
          %v1874 = vsel %vm1393, %v1873, %v1869
          %v1875 = vlaneseq
          %v1876 = vshrl.u32 %v1875, 7
          %v1877 = vsub.s32 %v1395, %v1876
          %v1878 = vrot.slane %v1117, %v1877
          %v1879 = vsel %vm1400, %v1878, %v1874
          %v1880 = vlaneseq
          %v1881 = vshrl.u32 %v1880, 7
          %v1882 = vsub.s32 %v1402, %v1881
          %v1883 = vrot.slane %v1120, %v1882
          %v1884 = vsel %vm1407, %v1883, %v1879
          %v1885 = vlaneseq
          %v1886 = vshrl.u32 %v1885, 7
          %v1887 = vsub.s32 %v1409, %v1886
          %v1888 = vrot.slane %v1123, %v1887
          %v1889 = vsel %vm1414, %v1888, %v1884
          %v1890 = vlaneseq
          %v1891 = vshrl.u32 %v1890, 7
          %v1892 = vsub.s32 %v1306, %v1891
          %v1893 = vrot.slane %v1126, %v1892
          %v1894 = vlaneseq
          %v1895 = vshrl.u32 %v1894, 7
          %v1896 = vsub.s32 %v1311, %v1895
          %v1897 = vrot.slane %v1129, %v1896
          %v1898 = vsel %vm1316, %v1897, %v1893
          %v1899 = vlaneseq
          %v1900 = vshrl.u32 %v1899, 7
          %v1901 = vsub.s32 %v1318, %v1900
          %v1902 = vrot.slane %v1132, %v1901
          %v1903 = vsel %vm1323, %v1902, %v1898
          %v1904 = vlaneseq
          %v1905 = vshrl.u32 %v1904, 7
          %v1906 = vsub.s32 %v1325, %v1905
          %v1907 = vrot.slane %v1135, %v1906
          %v1908 = vsel %vm1330, %v1907, %v1903
          %v1909 = vlaneseq
          %v1910 = vshrl.u32 %v1909, 7
          %v1911 = vsub.s32 %v1332, %v1910
          %v1912 = vrot.slane %v1138, %v1911
          %v1913 = vsel %vm1337, %v1912, %v1908
          %v1914 = vlaneseq
          %v1915 = vshrl.u32 %v1914, 7
          %v1916 = vsub.s32 %v1339, %v1915
          %v1917 = vrot.slane %v1141, %v1916
          %v1918 = vsel %vm1344, %v1917, %v1913
          %v1919 = vlaneseq
          %v1920 = vshrl.u32 %v1919, 7
          %v1921 = vsub.s32 %v1346, %v1920
          %v1922 = vrot.slane %v1144, %v1921
          %v1923 = vsel %vm1351, %v1922, %v1918
          %v1924 = vlaneseq
          %v1925 = vshrl.u32 %v1924, 7
          %v1926 = vsub.s32 %v1353, %v1925
          %v1927 = vrot.slane %v1147, %v1926
          %v1928 = vsel %vm1358, %v1927, %v1923
          %v1929 = vlaneseq
          %v1930 = vshrl.u32 %v1929, 7
          %v1931 = vsub.s32 %v1360, %v1930
          %v1932 = vrot.slane %v1150, %v1931
          %v1933 = vsel %vm1365, %v1932, %v1928
          %v1934 = vlaneseq
          %v1935 = vshrl.u32 %v1934, 7
          %v1936 = vsub.s32 %v1367, %v1935
          %v1937 = vrot.slane %v1153, %v1936
          %v1938 = vsel %vm1372, %v1937, %v1933
          %v1939 = vlaneseq
          %v1940 = vshrl.u32 %v1939, 7
          %v1941 = vsub.s32 %v1374, %v1940
          %v1942 = vrot.slane %v1156, %v1941
          %v1943 = vsel %vm1379, %v1942, %v1938
          %v1944 = vlaneseq
          %v1945 = vshrl.u32 %v1944, 7
          %v1946 = vsub.s32 %v1381, %v1945
          %v1947 = vrot.slane %v1159, %v1946
          %v1948 = vsel %vm1386, %v1947, %v1943
          %v1949 = vlaneseq
          %v1950 = vshrl.u32 %v1949, 7
          %v1951 = vsub.s32 %v1388, %v1950
          %v1952 = vrot.slane %v1162, %v1951
          %v1953 = vsel %vm1393, %v1952, %v1948
          %v1954 = vlaneseq
          %v1955 = vshrl.u32 %v1954, 7
          %v1956 = vsub.s32 %v1395, %v1955
          %v1957 = vrot.slane %v1165, %v1956
          %v1958 = vsel %vm1400, %v1957, %v1953
          %v1959 = vlaneseq
          %v1960 = vshrl.u32 %v1959, 7
          %v1961 = vsub.s32 %v1402, %v1960
          %v1962 = vrot.slane %v1168, %v1961
          %v1963 = vsel %vm1407, %v1962, %v1958
          %v1964 = vlaneseq
          %v1965 = vshrl.u32 %v1964, 7
          %v1966 = vsub.s32 %v1409, %v1965
          %v1967 = vrot.slane %v1171, %v1966
          %v1968 = vsel %vm1414, %v1967, %v1963
          %vm1969 = vcmask 1041409
          %v1970 = vsel %vm1969, %v1494, %v1415
          %vm1971 = vcmask 1042434
          %v1972 = vsel %vm1971, %v1573, %v1970
          %vm1973 = vcmask 1043459
          %v1974 = vsel %vm1973, %v1652, %v1972
          %vm1975 = vcmask 1044484
          %v1976 = vsel %vm1975, %v1731, %v1974
          %vm1977 = vcmask 1045509
          %v1978 = vsel %vm1977, %v1810, %v1976
          %vm1979 = vcmask 1046534
          %v1980 = vsel %vm1979, %v1889, %v1978
          %vm1981 = vcmask 1047559
          %v1982 = vsel %vm1981, %v1968, %v1980
          %v1984 = vmax.f32 %v1176, %v1982
          %1985 = vst [vmem:[%s1175] sm:$0xff] %v1984
        $region41: #{tpu_custom_call.1} parent=27 // loop_footer
          %s257 = sadd.s32 %s255, 1
        $region42: #{tpu_custom_call.1} parent=27 // loop_footer_branch
          %254 = sbr.rel target = $region38
        $region43: #{tpu_custom_call.1} parent=27 // loop_exit
          _
        // Predicated region
        $region44: #{tpu_custom_call.1} parent=27 // pred_check
          %p1986 = pneg %p235
        $region45: #{tpu_custom_call.1} parent=27 // pred_check_branch
          %1988 = sbr.rel (%p1986) target = $region47
        $region46: #{tpu_custom_call.1} parent=27 // pred_region
          %v1989 = vld [vmem:[#allocation2] sm:$0xff]
          %v1990 = vld [vmem:[#allocation2 + $0x8] sm:$0xff]
          %vm1991 = vcmp.gt.f32.partialorder %v1989, -inf
          %vm1992 = vcmp.gt.f32.partialorder %v1990, -inf
          %v1993 = vsel %vm1991, %v1989, 0.0
          %v1994 = vsel %vm1992, %v1990, 0.0
          %1995 = vst [vmem:[%s224] sm:$0xff] %v1993
          %1996 = vst [vmem:[%s224 + $0x8] sm:$0xff] %v1994
        $region47: #{tpu_custom_call.1} parent=27 // pred_fallthru
          _
        %s1997 = sand.u32 %s118, 1
        %s1998 = scalar_lea.sflag [#allocation8], %s1997
        %s1999 = sand.u32 %s118, 1
        %s2000 = smul.addr %s1999, 16
        %s2001 = scalar_lea.vmem [#allocation9], %s2000
        // Predicated region
        $region48: #{tpu_custom_call.1} parent=27 // pred_check
          %p2002 = pneg %p128
        $region49: #{tpu_custom_call.1} parent=27 // pred_check_branch
          %2004 = sbr.rel (%p2002) target = $region51
        $region50: #{tpu_custom_call.1} parent=27 // pred_region
          %s2006 = ssub.s32 256, 256
          %2007 = vsyncadd %s1998, %s2006
          %s2008 = smul.addr %s37, 2
          %s2009 = smul.addr %s36, 2
          %s2010 = sadd.s32 %s2008, %s2009
          %s2011 = smul.addr %s2010, 128
          %s2012 = scalar_lea.hbm %s4, %s2011
          %s2014 = sshll.u32 %s2001, 4
          %s2015 = int_to_ptr.vmem [resolvable:$true] %s2014
          %2017 = dma.vmem_to_hbm [thread:$0]  %s2015, 256, %s2012, %s1998
        $region51: #{tpu_custom_call.1} parent=27 // pred_fallthru
          _
      $region28: #{tpu_custom_call.1} parent=5 // pred_fallthru
        _
      %p2018 = scmp.le.s32.totalorder 2, %s26
      // Predicated region
      $region52: #{tpu_custom_call.1} parent=5 // pred_check
        %p2019 = pneg %p2018
      $region53: #{tpu_custom_call.1} parent=5 // pred_check_branch
        %2021 = sbr.rel (%p2019) target = $region55
      $region54: #{tpu_custom_call.1} parent=5 // pred_region
        %s2022 = ssub.s32 %s26, 2
        // Predicated region
        $region56: #{tpu_custom_call.1} parent=54 // pred_check
          %p2023 = pneg %p134
        $region57: #{tpu_custom_call.1} parent=54 // pred_check_branch
          %2025 = sbr.rel (%p2023) target = $region59
        $region58: #{tpu_custom_call.1} parent=54 // pred_region
          %s2026 = sand.u32 %s119, 1
          %s2027 = scalar_lea.sflag [#allocation8], %s2026
          %s2028 = sand.u32 %s119, 1
          %s2029 = smul.addr %s2028, 16
          %s2030 = scalar_lea.vmem [#allocation9], %s2029
          %2031 = dma.done %s2027, 256
        $region59: #{tpu_custom_call.1} parent=54 // pred_fallthru
          _
      $region55: #{tpu_custom_call.1} parent=5 // pred_fallthru
        _
    $region6: #{tpu_custom_call.1} parent=1 // loop_footer
      %s30 = sadd.s32 1, %s26
    $region7: #{tpu_custom_call.1} parent=1 // loop_footer_branch
      %25 = sbr.rel target = $region3
    $region8: #{tpu_custom_call.1} parent=1 // loop_exit
      _
    %2032 = vsyncpa [#allocation7], 1
    %s2033 = scalar_lea.sflag [#allocation7], 1
    %2034 = vsyncpa %s2033, 1
    %2035 = vsyncpa [#allocation8], 1
    %s2036 = scalar_lea.sflag [#allocation8], 1
    %2037 = vsyncpa %s2036, 1

</llo_original>
